<compile_context>
chip_gen: v6e
topology: v6e:2x2x1
jax: 0.10.0
libtpu: 0.0.40
codegen_flags: <defaults>
</compile_context>

<pallas_src>
import math

import jax
import jax.numpy as jnp
import numpy as np
from jax import lax
from jax.experimental import pallas as pl
from jax.experimental.pallas import tpu as pltpu

# ---- model config (hidden_dim must equal n_head * head_dim for the residual
#      `out + query` in the PyTorch forward to be shape-consistent) ----------
HIDDEN = 32
N_HEAD = 2
HEAD_DIM = 16
NUM_SRC_LANG = 2
NUM_TGT_LANG = 3
LN_EPS = 1e-5
SCALE = 1.0 / math.sqrt(HEAD_DIM)
H = N_HEAD * HEAD_DIM  # == HIDDEN


def _lang_attn_kernel(q_ref, kv_ref, mem_ref, mask_ref,
                      wq_ref, wkv_ref, wo_ref, gamma_ref, beta_ref,
                      out_ref, kvp_ref, score_ref):
    # Single grid step: whole batch resident in VMEM (everything is a few KB).
    B, qs, D = q_ref.shape
    ks = kv_ref.shape[1]
    ms = mem_ref.shape[1]
    kt = ms + ks

    q = q_ref[...]       # (B, qs, D)
    kv = kv_ref[...]     # (B, ks, D)
    mem = mem_ref[...]   # (B, ms, 2H)

    # --- projections: fold batch into the MXU M dimension ---
    query = jnp.dot(q.reshape(B * qs, D), wq_ref[...],
                    preferred_element_type=jnp.float32).reshape(B, qs, H)
    kv_proj = jnp.dot(kv.reshape(B * ks, D), wkv_ref[...],
                      preferred_element_type=jnp.float32).reshape(B, ks, 2 * H)
    kvp_ref[...] = kv_proj

    # c = concat([mem, kv_proj], seq axis) kept in registers (no VMEM scratch)
    c = jnp.concatenate([mem, kv_proj], axis=1)   # (B, kt, 2H)
    key = c[..., :H]                              # (B, kt, H)
    value = c[..., H:]                            # (B, kt, H)

    # mask predicate hoisted out of the head loop (shared by both heads)
    mask_b = mask_ref[...] != 0                   # (B, qs, kt)

    score_heads = []
    att_heads = []
    for h in range(N_HEAD):                       # static unroll, N_HEAD == 2
        lo = h * HEAD_DIM
        hi = lo + HEAD_DIM
        qh = query[..., lo:hi]                    # (B, qs, d)
        kh = key[..., lo:hi]                      # (B, kt, d)
        vh = value[..., lo:hi]                    # (B, kt, d)

        # batched over B: one dot per head for the whole batch
        s = jnp.einsum('bqd,bkd->bqk', qh, kh,
                       preferred_element_type=jnp.float32) * SCALE
        s = jnp.where(mask_b, -60000.0, s)        # exact masked_fill_ semantics
        score_heads.append(s)

        # softmax over the key axis (f32 on VPU/EUP)
        m = jnp.max(s, axis=-1, keepdims=True)
        e = jnp.exp(s - m)
        p = e / jnp.sum(e, axis=-1, keepdims=True)

        att_heads.append(jnp.einsum('bqk,bkd->bqd', p, vh,
                                    preferred_element_type=jnp.float32))

    # lane-dense score slab: (B, qs, N_HEAD*kt); wrapper restores torch layout
    score_ref[...] = jnp.concatenate(score_heads, axis=-1)

    # fused output projection: single (B*qs, H) @ (H, D) dot
    att = jnp.concatenate(att_heads, axis=-1)     # (B, qs, H)
    o = jnp.dot(att.reshape(B * qs, H), wo_ref[...],
                preferred_element_type=jnp.float32).reshape(B, qs, D)

    # residual with the *projected* query, then LayerNorm (post-norm)
    o = o + query
    mu = jnp.mean(o, axis=-1, keepdims=True)
    var = jnp.mean((o - mu) ** 2, axis=-1, keepdims=True)
    normed = (o - mu) * lax.rsqrt(var + LN_EPS)
    out_ref[...] = normed * gamma_ref[...] + beta_ref[...]


def language_wise_attention(q, kv, mem, mask, params, src_lang, tgt_lang):
    """Pallas-backed forward.  Returns (out, kv_proj, att_score) matching the
    PyTorch module: out (B,qs,D), kv_proj (B,ks,2H), att_score (B,qs,kt,n_head)."""
    bs, qs, D = q.shape
    ks = kv.shape[1]
    ms = mem.shape[1]
    kt = ms + ks

    # language selection = glue
    wq = params["wq"][src_lang]        # (D, H)
    wkv = params["wkv"][tgt_lang]      # (D, 2H)
    wo = params["wo"][src_lang]        # (H, D)
    gamma = params["ln_gamma"]         # (1, D)
    beta = params["ln_beta"]           # (1, D)
    mask_i = mask.astype(jnp.int32)

    out_shapes = (
        jax.ShapeDtypeStruct((bs, qs, D), jnp.float32),
        jax.ShapeDtypeStruct((bs, ks, 2 * H), jnp.float32),
        jax.ShapeDtypeStruct((bs, qs, N_HEAD * kt), jnp.float32),
    )
    # Whole problem in one grid step (everything fits trivially in VMEM on
    # v5e/v6e/v7x).  For large batches, block the leading axis and mark it
    # "parallel" so v7x's two TensorCores can split it.
    grid_spec = pltpu.PrefetchScalarGridSpec(
        num_scalar_prefetch=0,
        grid=(1,),
        in_specs=[
            pl.BlockSpec((bs, qs, D), lambda b: (0, 0, 0)),
            pl.BlockSpec((bs, ks, D), lambda b: (0, 0, 0)),
            pl.BlockSpec((bs, ms, 2 * H), lambda b: (0, 0, 0)),
            pl.BlockSpec((bs, qs, kt), lambda b: (0, 0, 0)),
            pl.BlockSpec((D, H), lambda b: (0, 0)),
            pl.BlockSpec((D, 2 * H), lambda b: (0, 0)),
            pl.BlockSpec((H, D), lambda b: (0, 0)),
            pl.BlockSpec((1, D), lambda b: (0, 0)),
            pl.BlockSpec((1, D), lambda b: (0, 0)),
        ],
        out_specs=[
            pl.BlockSpec((bs, qs, D), lambda b: (0, 0, 0)),
            pl.BlockSpec((bs, ks, 2 * H), lambda b: (0, 0, 0)),
            pl.BlockSpec((bs, qs, N_HEAD * kt), lambda b: (0, 0, 0)),
        ],
    )
    out, kv_proj, score_slab = pl.pallas_call(
        _lang_attn_kernel,
        out_shape=out_shapes,
        grid_spec=grid_spec,
        compiler_params=pltpu.CompilerParams(dimension_semantics=("parallel",)),
    )(q, kv, mem, mask_i, wq, wkv, wo, gamma, beta)

    # slab (B, qs, n_head*kt) -> PyTorch's (B, qs, kt, n_head) layout (glue)
    att_score = jnp.transpose(score_slab.reshape(bs, qs, N_HEAD, kt),
                              (0, 1, 3, 2))
    return out, kv_proj, att_score


def reference(q, kv, mem, mask, params, src_lang, tgt_lang):
    """Pure-JAX reference mirroring the PyTorch forward (eval mode)."""
    wq = params["wq"][src_lang]
    wkv = params["wkv"][tgt_lang]
    wo = params["wo"][src_lang]
    bs, qs, _ = q.shape

    kv_p = kv @ wkv
    c = jnp.concatenate([mem, kv_p], axis=1)
    key, value = c[..., :H], c[..., H:]
    query = q @ wq
    kt = c.shape[1]

    qh = query.reshape(bs, qs, N_HEAD, HEAD_DIM)
    kh = key.reshape(bs, kt, N_HEAD, HEAD_DIM)
    score = jnp.einsum("bqnd,bknd->bqkn", qh, kh) * SCALE
    score = jnp.where(mask.astype(bool)[..., None], -60000.0, score)
    prob = jax.nn.softmax(score, axis=2)
    vh = value.reshape(bs, kt, N_HEAD, HEAD_DIM)
    att = jnp.einsum("bqkn,bknd->bqnd", prob, vh).reshape(bs, qs, -1)
    o = att @ wo + query
    mu = o.mean(-1, keepdims=True)
    var = ((o - mu) ** 2).mean(-1, keepdims=True)
    o = (o - mu) / jnp.sqrt(var + LN_EPS) * params["ln_gamma"][0] + params["ln_beta"][0]
    return o, kv_p, score


if __name__ == "__main__":
    key = jax.random.PRNGKey(0)
    k_q, k_kv, k_mem, k_mask, k_wq, k_wkv, k_wo, k_g, k_b = jax.random.split(key, 9)

    BS, QS, KS, MS = 2, 8, 8, 8          # batch, query len, kv len, memory len
    q = jax.random.normal(k_q, (BS, QS, HIDDEN), dtype=jnp.float32)
    kv = jax.random.normal(k_kv, (BS, KS, HIDDEN), dtype=jnp.float32)
    mem = jax.random.normal(k_mem, (BS, MS, 2 * H), dtype=jnp.float32)
    mask = jax.random.bernoulli(k_mask, 0.3, (BS, QS, MS + KS)).astype(jnp.float32)

    params = {
        # stacked per-language weights, stored as (in, out)
        "wq": 0.05 * jax.random.normal(k_wq, (NUM_SRC_LANG, HIDDEN, H), jnp.float32),
        "wkv": 0.05 * jax.random.normal(k_wkv, (NUM_TGT_LANG, HIDDEN, 2 * H), jnp.float32),
        "wo": 0.05 * jax.random.normal(k_wo, (NUM_SRC_LANG, H, HIDDEN), jnp.float32),
        "ln_gamma": 1.0 + 0.1 * jax.random.normal(k_g, (1, HIDDEN), jnp.float32),
        "ln_beta": 0.1 * jax.random.normal(k_b, (1, HIDDEN), jnp.float32),
    }
    src_lang, tgt_lang = 1, 2

    out, kv_proj, att_score = language_wise_attention(
        q, kv, mem, mask, params, src_lang, tgt_lang)
    jax.block_until_ready((out, kv_proj, att_score))

    ref_out, ref_kvp, ref_score = reference(q, kv, mem, mask, params, src_lang, tgt_lang)
    np.testing.assert_allclose(np.asarray(out), np.asarray(ref_out), rtol=1e-4, atol=1e-4)
    np.testing.assert_allclose(np.asarray(kv_proj), np.asarray(ref_kvp), rtol=1e-4, atol=1e-4)
    np.testing.assert_allclose(np.asarray(att_score), np.asarray(ref_score), rtol=1e-4, atol=1e-4)

    print("KERNEL_OK")
</pallas_src>

<mosaic_0001>
module attributes {stable_mosaic.version = 11 : i64} {
  func.func @_lang_attn_kernel(%arg0: i32, %arg1: memref<2x8x32xf32, #tpu.memory_space<vmem>>, %arg2: memref<2x8x32xf32, #tpu.memory_space<vmem>>, %arg3: memref<2x8x64xf32, #tpu.memory_space<vmem>>, %arg4: memref<2x8x16xi32, #tpu.memory_space<vmem>>, %arg5: memref<32x32xf32, #tpu.memory_space<vmem>>, %arg6: memref<32x64xf32, #tpu.memory_space<vmem>>, %arg7: memref<32x32xf32, #tpu.memory_space<vmem>>, %arg8: memref<1x32xf32, #tpu.memory_space<vmem>>, %arg9: memref<1x32xf32, #tpu.memory_space<vmem>>, %arg10: memref<2x8x32xf32, #tpu.memory_space<vmem>>, %arg11: memref<2x8x64xf32, #tpu.memory_space<vmem>>, %arg12: memref<2x8x32xf32, #tpu.memory_space<vmem>>) attributes {dimension_semantics = [#tpu.dimension_semantics<parallel>], iteration_bounds = array<i64: 1>, scalar_prefetch = 0 : i64, scratch_operands = 0 : i64, tpu.core_type = #tpu.core_type<tc>, window_params = [{pipeline_mode = #tpu.pipeline_mode<synchronous>, transform_indices = @transform_0, window_bounds = array<i64: 2, 8, 32>}, {pipeline_mode = #tpu.pipeline_mode<synchronous>, transform_indices = @transform_1, window_bounds = array<i64: 2, 8, 32>}, {pipeline_mode = #tpu.pipeline_mode<synchronous>, transform_indices = @transform_2, window_bounds = array<i64: 2, 8, 64>}, {pipeline_mode = #tpu.pipeline_mode<synchronous>, transform_indices = @transform_3, window_bounds = array<i64: 2, 8, 16>}, {pipeline_mode = #tpu.pipeline_mode<synchronous>, transform_indices = @transform_4, window_bounds = array<i64: 32, 32>}, {pipeline_mode = #tpu.pipeline_mode<synchronous>, transform_indices = @transform_5, window_bounds = array<i64: 32, 64>}, {pipeline_mode = #tpu.pipeline_mode<synchronous>, transform_indices = @transform_6, window_bounds = array<i64: 32, 32>}, {pipeline_mode = #tpu.pipeline_mode<synchronous>, transform_indices = @transform_7, window_bounds = array<i64: 1, 32>}, {pipeline_mode = #tpu.pipeline_mode<synchronous>, transform_indices = @transform_8, window_bounds = array<i64: 1, 32>}, {pipeline_mode = #tpu.pipeline_mode<synchronous>, transform_indices = @transform_9, window_bounds = array<i64: 2, 8, 32>}, {pipeline_mode = #tpu.pipeline_mode<synchronous>, transform_indices = @transform_10, window_bounds = array<i64: 2, 8, 64>}, {pipeline_mode = #tpu.pipeline_mode<synchronous>, transform_indices = @transform_11, window_bounds = array<i64: 2, 8, 32>}]} {
    %c0 = arith.constant 0 : index
    %c0_0 = arith.constant 0 : index
    %c0_1 = arith.constant 0 : index
    %0 = vector.load %arg1[%c0, %c0_0, %c0_1] : memref<2x8x32xf32, #tpu.memory_space<vmem>>, vector<2x8x32xf32>
    %c0_2 = arith.constant 0 : index
    %c0_3 = arith.constant 0 : index
    %c0_4 = arith.constant 0 : index
    %1 = vector.load %arg2[%c0_2, %c0_3, %c0_4] : memref<2x8x32xf32, #tpu.memory_space<vmem>>, vector<2x8x32xf32>
    %c0_5 = arith.constant 0 : index
    %c0_6 = arith.constant 0 : index
    %c0_7 = arith.constant 0 : index
    %2 = vector.load %arg3[%c0_5, %c0_6, %c0_7] : memref<2x8x64xf32, #tpu.memory_space<vmem>>, vector<2x8x64xf32>
    %3 = vector.shape_cast %0 : vector<2x8x32xf32> to vector<16x32xf32>
    %c0_8 = arith.constant 0 : index
    %c0_9 = arith.constant 0 : index
    %4 = vector.load %arg5[%c0_8, %c0_9] : memref<32x32xf32, #tpu.memory_space<vmem>>, vector<32x32xf32>
    %cst = arith.constant dense<0.000000e+00> : vector<16x32xf32>
    %5 = tpu.matmul %3, %4, %cst {dimension_numbers = #tpu.dot_dimension_numbers<[1], [0], [0], [1], [0, 0, 1, 1], [], []>} : vector<16x32xf32>, vector<32x32xf32>, vector<16x32xf32> -> vector<16x32xf32>
    %6 = vector.shape_cast %5 : vector<16x32xf32> to vector<2x8x32xf32>
    %7 = vector.shape_cast %1 : vector<2x8x32xf32> to vector<16x32xf32>
    %c0_10 = arith.constant 0 : index
    %c0_11 = arith.constant 0 : index
    %8 = vector.load %arg6[%c0_10, %c0_11] : memref<32x64xf32, #tpu.memory_space<vmem>>, vector<32x64xf32>
    %cst_12 = arith.constant dense<0.000000e+00> : vector<16x64xf32>
    %9 = tpu.matmul %7, %8, %cst_12 {dimension_numbers = #tpu.dot_dimension_numbers<[1], [0], [0], [1], [0, 0, 1, 1], [], []>} : vector<16x32xf32>, vector<32x64xf32>, vector<16x64xf32> -> vector<16x64xf32>
    %10 = vector.shape_cast %9 : vector<16x64xf32> to vector<2x8x64xf32>
    %c0_13 = arith.constant 0 : index
    %c0_14 = arith.constant 0 : index
    %c0_15 = arith.constant 0 : index
    %11 = vector.load %arg11[%c0_13, %c0_14, %c0_15] : memref<2x8x64xf32, #tpu.memory_space<vmem>>, vector<2x8x64xf32>
    tpu.vector_store %arg11[%c0_13, %c0_14, %c0_15], %10 {strides = array<i32>} : memref<2x8x64xf32, #tpu.memory_space<vmem>>, vector<2x8x64xf32>,
    %12 = tpu.concatenate %2, %10 in 1 : vector<2x8x64xf32>, vector<2x8x64xf32> -> vector<2x16x64xf32>
    %13 = vector.extract_strided_slice %12 {offsets = [0, 0, 0], sizes = [2, 16, 32], strides = [1, 1, 1]} : vector<2x16x64xf32> to vector<2x16x32xf32>
    %14 = vector.extract_strided_slice %12 {offsets = [0, 0, 32], sizes = [2, 16, 32], strides = [1, 1, 1]} : vector<2x16x64xf32> to vector<2x16x32xf32>
    %c0_16 = arith.constant 0 : index
    %c0_17 = arith.constant 0 : index
    %c0_18 = arith.constant 0 : index
    %15 = vector.load %arg4[%c0_16, %c0_17, %c0_18] : memref<2x8x16xi32, #tpu.memory_space<vmem>>, vector<2x8x16xi32>
    %c0_i32 = arith.constant 0 : i32
    %16 = vector.broadcast %c0_i32 : i32 to vector<2x8x16xi32>
    %17 = arith.cmpi ne, %15, %16 : vector<2x8x16xi32>
    %18 = vector.extract_strided_slice %6 {offsets = [0, 0, 0], sizes = [2, 8, 16], strides = [1, 1, 1]} : vector<2x8x32xf32> to vector<2x8x16xf32>
    %19 = vector.extract_strided_slice %13 {offsets = [0, 0, 0], sizes = [2, 16, 16], strides = [1, 1, 1]} : vector<2x16x32xf32> to vector<2x16x16xf32>
    %20 = vector.extract_strided_slice %14 {offsets = [0, 0, 0], sizes = [2, 16, 16], strides = [1, 1, 1]} : vector<2x16x32xf32> to vector<2x16x16xf32>
    "tpu.trace_start"() <{level = 10 : i32, message = "bqd,bkd->bqk"}> : () -> ()
    %cst_19 = arith.constant dense<0.000000e+00> : vector<2x8x16xf32>
    %21 = tpu.matmul %18, %19, %cst_19 {dimension_numbers = #tpu.dot_dimension_numbers<[2], [2], [1], [1], [0, 0, 0, 1, 1, 1], [0], [0]>} : vector<2x8x16xf32>, vector<2x16x16xf32>, vector<2x8x16xf32> -> vector<2x8x16xf32>
    "tpu.trace_stop"() : () -> ()
    %cst_20 = arith.constant 2.500000e-01 : f32
    %22 = vector.broadcast %cst_20 : f32 to vector<2x8x16xf32>
    %23 = arith.mulf %21, %22 : vector<2x8x16xf32>
    %cst_21 = arith.constant -6.000000e+04 : f32
    %24 = vector.broadcast %cst_21 : f32 to vector<2x8x16xf32>
    %25 = arith.select %17, %24, %23 : vector<2x8x16xi1>, vector<2x8x16xf32>
    %cst_22 = arith.constant dense<0xFF800000> : vector<2x8xf32>
    %26 = vector.multi_reduction <maximumf>, %25, %cst_22 [2] : vector<2x8x16xf32> to vector<2x8xf32>
    %27 = vector.shape_cast %26 : vector<2x8xf32> to vector<2x8x1xf32>
    %28 = vector.broadcast %27 : vector<2x8x1xf32> to vector<2x8x16xf32>
    %29 = arith.subf %25, %28 : vector<2x8x16xf32>
    %30 = math.exp %29 : vector<2x8x16xf32>
    %cst_23 = arith.constant dense<0.000000e+00> : vector<2x8xf32>
    %31 = vector.multi_reduction <add>, %30, %cst_23 [2] : vector<2x8x16xf32> to vector<2x8xf32>
    %32 = vector.shape_cast %31 : vector<2x8xf32> to vector<2x8x1xf32>
    %33 = vector.broadcast %32 : vector<2x8x1xf32> to vector<2x8x16xf32>
    %34 = arith.divf %30, %33 : vector<2x8x16xf32>
    "tpu.trace_start"() <{level = 10 : i32, message = "bqk,bkd->bqd"}> : () -> ()
    %cst_24 = arith.constant dense<0.000000e+00> : vector<2x8x16xf32>
    %35 = tpu.matmul %34, %20, %cst_24 {dimension_numbers = #tpu.dot_dimension_numbers<[2], [1], [1], [2], [0, 0, 0, 1, 1, 2], [0], [0]>} : vector<2x8x16xf32>, vector<2x16x16xf32>, vector<2x8x16xf32> -> vector<2x8x16xf32>
    "tpu.trace_stop"() : () -> ()
    %36 = vector.extract_strided_slice %6 {offsets = [0, 0, 16], sizes = [2, 8, 16], strides = [1, 1, 1]} : vector<2x8x32xf32> to vector<2x8x16xf32>
    %37 = vector.extract_strided_slice %13 {offsets = [0, 0, 16], sizes = [2, 16, 16], strides = [1, 1, 1]} : vector<2x16x32xf32> to vector<2x16x16xf32>
    %38 = vector.extract_strided_slice %14 {offsets = [0, 0, 16], sizes = [2, 16, 16], strides = [1, 1, 1]} : vector<2x16x32xf32> to vector<2x16x16xf32>
    "tpu.trace_start"() <{level = 10 : i32, message = "bqd,bkd->bqk"}> : () -> ()
    %cst_25 = arith.constant dense<0.000000e+00> : vector<2x8x16xf32>
    %39 = tpu.matmul %36, %37, %cst_25 {dimension_numbers = #tpu.dot_dimension_numbers<[2], [2], [1], [1], [0, 0, 0, 1, 1, 1], [0], [0]>} : vector<2x8x16xf32>, vector<2x16x16xf32>, vector<2x8x16xf32> -> vector<2x8x16xf32>
    "tpu.trace_stop"() : () -> ()
    %cst_26 = arith.constant 2.500000e-01 : f32
    %40 = vector.broadcast %cst_26 : f32 to vector<2x8x16xf32>
    %41 = arith.mulf %39, %40 : vector<2x8x16xf32>
    %cst_27 = arith.constant -6.000000e+04 : f32
    %42 = vector.broadcast %cst_27 : f32 to vector<2x8x16xf32>
    %43 = arith.select %17, %42, %41 : vector<2x8x16xi1>, vector<2x8x16xf32>
    %cst_28 = arith.constant dense<0xFF800000> : vector<2x8xf32>
    %44 = vector.multi_reduction <maximumf>, %43, %cst_28 [2] : vector<2x8x16xf32> to vector<2x8xf32>
    %45 = vector.shape_cast %44 : vector<2x8xf32> to vector<2x8x1xf32>
    %46 = vector.broadcast %45 : vector<2x8x1xf32> to vector<2x8x16xf32>
    %47 = arith.subf %43, %46 : vector<2x8x16xf32>
    %48 = math.exp %47 : vector<2x8x16xf32>
    %cst_29 = arith.constant dense<0.000000e+00> : vector<2x8xf32>
    %49 = vector.multi_reduction <add>, %48, %cst_29 [2] : vector<2x8x16xf32> to vector<2x8xf32>
    %50 = vector.shape_cast %49 : vector<2x8xf32> to vector<2x8x1xf32>
    %51 = vector.broadcast %50 : vector<2x8x1xf32> to vector<2x8x16xf32>
    %52 = arith.divf %48, %51 : vector<2x8x16xf32>
    "tpu.trace_start"() <{level = 10 : i32, message = "bqk,bkd->bqd"}> : () -> ()
    %cst_30 = arith.constant dense<0.000000e+00> : vector<2x8x16xf32>
    %53 = tpu.matmul %52, %38, %cst_30 {dimension_numbers = #tpu.dot_dimension_numbers<[2], [1], [1], [2], [0, 0, 0, 1, 1, 2], [0], [0]>} : vector<2x8x16xf32>, vector<2x16x16xf32>, vector<2x8x16xf32> -> vector<2x8x16xf32>
    "tpu.trace_stop"() : () -> ()
    %54 = tpu.concatenate %25, %43 in 2 : vector<2x8x16xf32>, vector<2x8x16xf32> -> vector<2x8x32xf32>
    %c0_31 = arith.constant 0 : index
    %c0_32 = arith.constant 0 : index
    %c0_33 = arith.constant 0 : index
    %55 = vector.load %arg12[%c0_31, %c0_32, %c0_33] : memref<2x8x32xf32, #tpu.memory_space<vmem>>, vector<2x8x32xf32>
    tpu.vector_store %arg12[%c0_31, %c0_32, %c0_33], %54 {strides = array<i32>} : memref<2x8x32xf32, #tpu.memory_space<vmem>>, vector<2x8x32xf32>,
    %56 = tpu.concatenate %35, %53 in 2 : vector<2x8x16xf32>, vector<2x8x16xf32> -> vector<2x8x32xf32>
    %57 = vector.shape_cast %56 : vector<2x8x32xf32> to vector<16x32xf32>
    %c0_34 = arith.constant 0 : index
    %c0_35 = arith.constant 0 : index
    %58 = vector.load %arg7[%c0_34, %c0_35] : memref<32x32xf32, #tpu.memory_space<vmem>>, vector<32x32xf32>
    %cst_36 = arith.constant dense<0.000000e+00> : vector<16x32xf32>
    %59 = tpu.matmul %57, %58, %cst_36 {dimension_numbers = #tpu.dot_dimension_numbers<[1], [0], [0], [1], [0, 0, 1, 1], [], []>} : vector<16x32xf32>, vector<32x32xf32>, vector<16x32xf32> -> vector<16x32xf32>
    %60 = vector.shape_cast %59 : vector<16x32xf32> to vector<2x8x32xf32>
    %61 = arith.addf %60, %6 : vector<2x8x32xf32>
    %cst_37 = arith.constant dense<0.000000e+00> : vector<2x8xf32>
    %62 = vector.multi_reduction <add>, %61, %cst_37 [2] : vector<2x8x32xf32> to vector<2x8xf32>
    %63 = vector.shape_cast %62 : vector<2x8xf32> to vector<2x8x1xf32>
    %cst_38 = arith.constant 3.200000e+01 : f32
    %64 = vector.broadcast %cst_38 : f32 to vector<2x8x1xf32>
    %65 = arith.divf %63, %64 : vector<2x8x1xf32>
    %66 = vector.broadcast %65 : vector<2x8x1xf32> to vector<2x8x32xf32>
    %67 = arith.subf %61, %66 : vector<2x8x32xf32>
    %68 = arith.mulf %67, %67 : vector<2x8x32xf32>
    %cst_39 = arith.constant dense<0.000000e+00> : vector<2x8xf32>
    %69 = vector.multi_reduction <add>, %68, %cst_39 [2] : vector<2x8x32xf32> to vector<2x8xf32>
    %70 = vector.shape_cast %69 : vector<2x8xf32> to vector<2x8x1xf32>
    %cst_40 = arith.constant 3.200000e+01 : f32
    %71 = vector.broadcast %cst_40 : f32 to vector<2x8x1xf32>
    %72 = arith.divf %70, %71 : vector<2x8x1xf32>
    %73 = vector.broadcast %65 : vector<2x8x1xf32> to vector<2x8x32xf32>
    %74 = arith.subf %61, %73 : vector<2x8x32xf32>
    %cst_41 = arith.constant 9.99999974E-6 : f32
    %75 = vector.broadcast %cst_41 : f32 to vector<2x8x1xf32>
    %76 = arith.addf %72, %75 : vector<2x8x1xf32>
    %77 = math.rsqrt %76 : vector<2x8x1xf32>
    %78 = vector.broadcast %77 : vector<2x8x1xf32> to vector<2x8x32xf32>
    %79 = arith.mulf %74, %78 : vector<2x8x32xf32>
    %c0_42 = arith.constant 0 : index
    %c0_43 = arith.constant 0 : index
    %80 = vector.load %arg8[%c0_42, %c0_43] : memref<1x32xf32, #tpu.memory_space<vmem>>, vector<1x32xf32>
    %81 = vector.shape_cast %80 : vector<1x32xf32> to vector<1x1x32xf32>
    %82 = vector.broadcast %81 : vector<1x1x32xf32> to vector<2x8x32xf32>
    %83 = arith.mulf %79, %82 : vector<2x8x32xf32>
    %c0_44 = arith.constant 0 : index
    %c0_45 = arith.constant 0 : index
    %84 = vector.load %arg9[%c0_44, %c0_45] : memref<1x32xf32, #tpu.memory_space<vmem>>, vector<1x32xf32>
    %85 = vector.shape_cast %84 : vector<1x32xf32> to vector<1x1x32xf32>
    %86 = vector.broadcast %85 : vector<1x1x32xf32> to vector<2x8x32xf32>
    %87 = arith.addf %83, %86 : vector<2x8x32xf32>
    %c0_46 = arith.constant 0 : index
    %c0_47 = arith.constant 0 : index
    %c0_48 = arith.constant 0 : index
    %88 = vector.load %arg10[%c0_46, %c0_47, %c0_48] : memref<2x8x32xf32, #tpu.memory_space<vmem>>, vector<2x8x32xf32>
    tpu.vector_store %arg10[%c0_46, %c0_47, %c0_48], %87 {strides = array<i32>} : memref<2x8x32xf32, #tpu.memory_space<vmem>>, vector<2x8x32xf32>,
    return
  }
  func.func @transform_0(%arg0: i32) -> (i32, i32, i32) {
    %c0_i32 = arith.constant 0 : i32
    %c0_i32_0 = arith.constant 0 : i32
    %c0_i32_1 = arith.constant 0 : i32
    %c0_i32_2 = arith.constant 0 : i32
    return %c0_i32, %c0_i32_0, %c0_i32_1 : i32, i32, i32
  }
  func.func @transform_1(%arg0: i32) -> (i32, i32, i32) {
    %c0_i32 = arith.constant 0 : i32
    %c0_i32_0 = arith.constant 0 : i32
    %c0_i32_1 = arith.constant 0 : i32
    %c0_i32_2 = arith.constant 0 : i32
    return %c0_i32, %c0_i32_0, %c0_i32_1 : i32, i32, i32
  }
  func.func @transform_2(%arg0: i32) -> (i32, i32, i32) {
    %c0_i32 = arith.constant 0 : i32
    %c0_i32_0 = arith.constant 0 : i32
    %c0_i32_1 = arith.constant 0 : i32
    %c0_i32_2 = arith.constant 0 : i32
    return %c0_i32, %c0_i32_0, %c0_i32_1 : i32, i32, i32
  }
  func.func @transform_3(%arg0: i32) -> (i32, i32, i32) {
    %c0_i32 = arith.constant 0 : i32
    %c0_i32_0 = arith.constant 0 : i32
    %c0_i32_1 = arith.constant 0 : i32
    %c0_i32_2 = arith.constant 0 : i32
    return %c0_i32, %c0_i32_0, %c0_i32_1 : i32, i32, i32
  }
  func.func @transform_4(%arg0: i32) -> (i32, i32) {
    %c0_i32 = arith.constant 0 : i32
    %c0_i32_0 = arith.constant 0 : i32
    %c0_i32_1 = arith.constant 0 : i32
    return %c0_i32, %c0_i32_0 : i32, i32
  }
  func.func @transform_5(%arg0: i32) -> (i32, i32) {
    %c0_i32 = arith.constant 0 : i32
    %c0_i32_0 = arith.constant 0 : i32
    %c0_i32_1 = arith.constant 0 : i32
    return %c0_i32, %c0_i32_0 : i32, i32
  }
  func.func @transform_6(%arg0: i32) -> (i32, i32) {
    %c0_i32 = arith.constant 0 : i32
    %c0_i32_0 = arith.constant 0 : i32
    %c0_i32_1 = arith.constant 0 : i32
    return %c0_i32, %c0_i32_0 : i32, i32
  }
  func.func @transform_7(%arg0: i32) -> (i32, i32) {
    %c0_i32 = arith.constant 0 : i32
    %c0_i32_0 = arith.constant 0 : i32
    %c0_i32_1 = arith.constant 0 : i32
    return %c0_i32, %c0_i32_0 : i32, i32
  }
  func.func @transform_8(%arg0: i32) -> (i32, i32) {
    %c0_i32 = arith.constant 0 : i32
    %c0_i32_0 = arith.constant 0 : i32
    %c0_i32_1 = arith.constant 0 : i32
    return %c0_i32, %c0_i32_0 : i32, i32
  }
  func.func @transform_9(%arg0: i32) -> (i32, i32, i32) {
    %c0_i32 = arith.constant 0 : i32
    %c0_i32_0 = arith.constant 0 : i32
    %c0_i32_1 = arith.constant 0 : i32
    %c0_i32_2 = arith.constant 0 : i32
    return %c0_i32, %c0_i32_0, %c0_i32_1 : i32, i32, i32
  }
  func.func @transform_10(%arg0: i32) -> (i32, i32, i32) {
    %c0_i32 = arith.constant 0 : i32
    %c0_i32_0 = arith.constant 0 : i32
    %c0_i32_1 = arith.constant 0 : i32
    %c0_i32_2 = arith.constant 0 : i32
    return %c0_i32, %c0_i32_0, %c0_i32_1 : i32, i32, i32
  }
  func.func @transform_11(%arg0: i32) -> (i32, i32, i32) {
    %c0_i32 = arith.constant 0 : i32
    %c0_i32_0 = arith.constant 0 : i32
    %c0_i32_1 = arith.constant 0 : i32
    %c0_i32_2 = arith.constant 0 : i32
    return %c0_i32, %c0_i32_0, %c0_i32_1 : i32, i32, i32
  }
}

</mosaic_0001>

<llo_original>
// kernel: tpu_custom_call.1
$region0: #{tpu_custom_call.1}
  #allocation0 [shape = 'u32[]', space=smem, size = 0x4, offset = 0x4, fixed_abs, tag = 'smem constant byte address 0x4 - core index']
  #allocation1 [shape = 'u32[144,128]{1,0:T(1,128)}', space=vmem, size = 0x12000, scoped, tag = 'internal scratch']
  %s0 = inlined_call_operand.hbm [shape: f32[2,8,32], index: 0, kind: input, shape index: {}]
  %s1 = inlined_call_operand.hbm [shape: f32[2,8,32], index: 1, kind: input, shape index: {}]
  %s2 = inlined_call_operand.hbm [shape: f32[2,8,64], index: 2, kind: input, shape index: {}]
  %s3 = inlined_call_operand.hbm [shape: s32[2,8,16], index: 3, kind: input, shape index: {}]
  %s4 = inlined_call_operand.hbm [shape: f32[32,32], index: 4, kind: input, shape index: {}]
  %s5 = inlined_call_operand.hbm [shape: f32[32,64], index: 5, kind: input, shape index: {}]
  %s6 = inlined_call_operand.hbm [shape: f32[32,32], index: 6, kind: input, shape index: {}]
  %s7 = inlined_call_operand.vmem [shape: f32[1,32], index: 7, kind: input, shape index: {}]
  %s8 = inlined_call_operand.vmem [shape: f32[1,32], index: 8, kind: input, shape index: {}]
  %s9 = inlined_call_operand.hbm [shape: f32[2,8,32], index: 9, kind: output, shape index: {0}]
  %s10 = inlined_call_operand.hbm [shape: f32[2,8,64], index: 10, kind: output, shape index: {1}]
  %s11 = inlined_call_operand.hbm [shape: f32[2,8,32], index: 11, kind: output, shape index: {2}]
  %12 = xla_tuple %s9, %s10, %s11
  %s13 = sld [smem:[#allocation0]]
  $region90: #{tpu_custom_call.1} parent=0
    _
  %s15 = ssub.s32 1, %s13
  %s16 = scalar_select 0, %s15, %s13
  $region1: #{tpu_custom_call.1} parent=0
    #allocation2 [shape = 'u8[8192]{0}', space=vmem, size = 0x2000, scoped, tag = 'input window, operand 0, single buffered']
    #allocation3 [shape = 's32[1]{0}', space=sflag, size = 0x4, scoped, tag = 'scoped memory for tpu_custom_call.1']
    #allocation4 [shape = 's32[1]{0}', space=sflag, size = 0x4, scoped, tag = 'scoped memory for tpu_custom_call.1']
    #allocation5 [shape = 'u8[8192]{0}', space=vmem, size = 0x2000, scoped, tag = 'input window, operand 1, single buffered']
    #allocation6 [shape = 's32[1]{0}', space=sflag, size = 0x4, scoped, tag = 'scoped memory for tpu_custom_call.1']
    #allocation7 [shape = 'u8[8192]{0}', space=vmem, size = 0x2000, scoped, tag = 'input window, operand 2, single buffered']
    #allocation8 [shape = 'u8[8192]{0}', space=vmem, size = 0x2000, scoped, tag = 'input window, operand 3, single buffered']
    #allocation9 [shape = 's32[1]{0}', space=sflag, size = 0x4, scoped, tag = 'scoped memory for tpu_custom_call.1']
    #allocation10 [shape = 'u8[16384]{0}', space=vmem, size = 0x4000, scoped, tag = 'input window, operand 4, single buffered']
    #allocation11 [shape = 'u8[16384]{0}', space=vmem, size = 0x4000, scoped, tag = 'input window, operand 5, single buffered']
    #allocation12 [shape = 's32[1]{0}', space=sflag, size = 0x4, scoped, tag = 'scoped memory for tpu_custom_call.1']
    #allocation13 [shape = 'u8[16384]{0}', space=vmem, size = 0x4000, scoped, tag = 'input window, operand 6, single buffered']
    #allocation14 [shape = 'u8[8192]{0}', space=vmem, size = 0x2000, scoped, tag = 'output window, operand 0, single buffered']
    #allocation15 [shape = 'u8[8192]{0}', space=vmem, size = 0x2000, scoped, tag = 'output window, operand 1, single buffered']
    #allocation16 [shape = 's32[1]{0}', space=sflag, size = 0x4, scoped, tag = 'scoped memory for tpu_custom_call.1']
    #allocation17 [shape = 'u8[8192]{0}', space=vmem, size = 0x2000, scoped, tag = 'output window, operand 2, single buffered']
    %17 = vsyncpa [#allocation3], 0
    %18 = vsyncpa [#allocation6], 0
    %19 = vsyncpa [#allocation9], 0
    %20 = vsyncpa [#allocation12], 0
    %21 = vsyncpa [#allocation4], 0
    %22 = vsyncpa [#allocation16], 0
    // Predicated region
    $region2: #{tpu_custom_call.1} parent=1 // pred_check
      _
    $region3: #{tpu_custom_call.1} parent=1 // pred_check_branch
      %24 = sbr.rel (0) target = $region5
    $region4: #{tpu_custom_call.1} parent=1 // pred_region
      %s26 = ssub.s32 256, 256
      %27 = vsyncadd [#allocation3], %s26
      %s28 = sshll.u32 [#allocation2], 4
      %s29 = int_to_ptr.vmem [resolvable:$true] %s28
      %34 = dma.hbm_to_vmem [thread:$0]  %s0, 256, %s29, [#allocation3], 128, 128, 8
    $region5: #{tpu_custom_call.1} parent=1 // pred_fallthru
      _
    // Predicated region
    $region6: #{tpu_custom_call.1} parent=1 // pred_check
      _
    $region7: #{tpu_custom_call.1} parent=1 // pred_check_branch
      %36 = sbr.rel (0) target = $region9
    $region8: #{tpu_custom_call.1} parent=1 // pred_region
      %s38 = ssub.s32 256, 256
      %39 = vsyncadd [#allocation6], %s38
      %s40 = sshll.u32 [#allocation5], 4
      %s41 = int_to_ptr.vmem [resolvable:$true] %s40
      %46 = dma.hbm_to_vmem [thread:$0]  %s1, 256, %s41, [#allocation6], 128, 128, 8
    $region9: #{tpu_custom_call.1} parent=1 // pred_fallthru
      _
    // Predicated region
    $region10: #{tpu_custom_call.1} parent=1 // pred_check
      _
    $region11: #{tpu_custom_call.1} parent=1 // pred_check_branch
      %48 = sbr.rel (0) target = $region13
    $region12: #{tpu_custom_call.1} parent=1 // pred_region
      %s50 = ssub.s32 256, 256
      %51 = vsyncadd [#allocation6], %s50
      %s52 = sshll.u32 [#allocation7], 4
      %s53 = int_to_ptr.vmem [resolvable:$true] %s52
      %58 = dma.hbm_to_vmem [thread:$0]  %s2, 256, %s53, [#allocation6], 128, 128, 8
    $region13: #{tpu_custom_call.1} parent=1 // pred_fallthru
      _
    // Predicated region
    $region14: #{tpu_custom_call.1} parent=1 // pred_check
      _
    $region15: #{tpu_custom_call.1} parent=1 // pred_check_branch
      %60 = sbr.rel (0) target = $region17
    $region16: #{tpu_custom_call.1} parent=1 // pred_region
      %s62 = ssub.s32 256, 256
      %63 = vsyncadd [#allocation9], %s62
      %s64 = sshll.u32 [#allocation8], 4
      %s65 = int_to_ptr.vmem [resolvable:$true] %s64
      %70 = dma.hbm_to_vmem [thread:$0]  %s3, 256, %s65, [#allocation9], 128, 128, 8
    $region17: #{tpu_custom_call.1} parent=1 // pred_fallthru
      _
    // Predicated region
    $region18: #{tpu_custom_call.1} parent=1 // pred_check
      _
    $region19: #{tpu_custom_call.1} parent=1 // pred_check_branch
      %72 = sbr.rel (0) target = $region21
    $region20: #{tpu_custom_call.1} parent=1 // pred_region
      %s74 = ssub.s32 512, 512
      %75 = vsyncadd [#allocation9], %s74
      %s76 = sshll.u32 [#allocation10], 4
      %s77 = int_to_ptr.vmem [resolvable:$true] %s76
      %82 = dma.hbm_to_vmem [thread:$0]  %s4, 512, %s77, [#allocation9], 128, 128, 8
    $region21: #{tpu_custom_call.1} parent=1 // pred_fallthru
      _
    // Predicated region
    $region22: #{tpu_custom_call.1} parent=1 // pred_check
      _
    $region23: #{tpu_custom_call.1} parent=1 // pred_check_branch
      %84 = sbr.rel (0) target = $region25
    $region24: #{tpu_custom_call.1} parent=1 // pred_region
      %s86 = ssub.s32 512, 512
      %87 = vsyncadd [#allocation12], %s86
      %s88 = sshll.u32 [#allocation11], 4
      %s89 = int_to_ptr.vmem [resolvable:$true] %s88
      %94 = dma.hbm_to_vmem [thread:$0]  %s5, 512, %s89, [#allocation12], 128, 128, 8
    $region25: #{tpu_custom_call.1} parent=1 // pred_fallthru
      _
    // Predicated region
    $region26: #{tpu_custom_call.1} parent=1 // pred_check
      _
    $region27: #{tpu_custom_call.1} parent=1 // pred_check_branch
      %96 = sbr.rel (0) target = $region29
    $region28: #{tpu_custom_call.1} parent=1 // pred_region
      %s98 = ssub.s32 512, 512
      %99 = vsyncadd [#allocation12], %s98
      %s100 = sshll.u32 [#allocation13], 4
      %s101 = int_to_ptr.vmem [resolvable:$true] %s100
      %106 = dma.hbm_to_vmem [thread:$0]  %s6, 512, %s101, [#allocation12], 128, 128, 8
    $region29: #{tpu_custom_call.1} parent=1 // pred_fallthru
      _
    // Predicated region
    $region30: #{tpu_custom_call.1} parent=1 // pred_check
      _
    $region31: #{tpu_custom_call.1} parent=1 // pred_check_branch
      %108 = sbr.rel (0) target = $region33
    $region32: #{tpu_custom_call.1} parent=1 // pred_region
      _
    $region33: #{tpu_custom_call.1} parent=1 // pred_fallthru
      _
    // Predicated region
    $region34: #{tpu_custom_call.1} parent=1 // pred_check
      _
    $region35: #{tpu_custom_call.1} parent=1 // pred_check_branch
      %110 = sbr.rel (0) target = $region37
    $region36: #{tpu_custom_call.1} parent=1 // pred_region
      _
    $region37: #{tpu_custom_call.1} parent=1 // pred_fallthru
      _
    // Predicated region
    $region38: #{tpu_custom_call.1} parent=1 // pred_check
      _
    $region39: #{tpu_custom_call.1} parent=1 // pred_check_branch
      %112 = sbr.rel (0) target = $region41
    $region40: #{tpu_custom_call.1} parent=1 // pred_region
      %113 = dma.done [#allocation3], 256
    $region41: #{tpu_custom_call.1} parent=1 // pred_fallthru
      _
    // Predicated region
    $region42: #{tpu_custom_call.1} parent=1 // pred_check
      _
    $region43: #{tpu_custom_call.1} parent=1 // pred_check_branch
      %115 = sbr.rel (0) target = $region45
    $region44: #{tpu_custom_call.1} parent=1 // pred_region
      %116 = dma.done [#allocation6], 256
    $region45: #{tpu_custom_call.1} parent=1 // pred_fallthru
      _
    // Predicated region
    $region46: #{tpu_custom_call.1} parent=1 // pred_check
      _
    $region47: #{tpu_custom_call.1} parent=1 // pred_check_branch
      %118 = sbr.rel (0) target = $region49
    $region48: #{tpu_custom_call.1} parent=1 // pred_region
      %119 = dma.done [#allocation6], 256
    $region49: #{tpu_custom_call.1} parent=1 // pred_fallthru
      _
    // Predicated region
    $region50: #{tpu_custom_call.1} parent=1 // pred_check
      _
    $region51: #{tpu_custom_call.1} parent=1 // pred_check_branch
      %121 = sbr.rel (0) target = $region53
    $region52: #{tpu_custom_call.1} parent=1 // pred_region
      %122 = dma.done [#allocation9], 256
    $region53: #{tpu_custom_call.1} parent=1 // pred_fallthru
      _
    // Predicated region
    $region54: #{tpu_custom_call.1} parent=1 // pred_check
      _
    $region55: #{tpu_custom_call.1} parent=1 // pred_check_branch
      %124 = sbr.rel (0) target = $region57
    $region56: #{tpu_custom_call.1} parent=1 // pred_region
      %125 = dma.done [#allocation9], 512
    $region57: #{tpu_custom_call.1} parent=1 // pred_fallthru
      _
    // Predicated region
    $region58: #{tpu_custom_call.1} parent=1 // pred_check
      _
    $region59: #{tpu_custom_call.1} parent=1 // pred_check_branch
      %127 = sbr.rel (0) target = $region61
    $region60: #{tpu_custom_call.1} parent=1 // pred_region
      %128 = dma.done [#allocation12], 512
    $region61: #{tpu_custom_call.1} parent=1 // pred_fallthru
      _
    // Predicated region
    $region62: #{tpu_custom_call.1} parent=1 // pred_check
      _
    $region63: #{tpu_custom_call.1} parent=1 // pred_check_branch
      %130 = sbr.rel (0) target = $region65
    $region64: #{tpu_custom_call.1} parent=1 // pred_region
      %131 = dma.done [#allocation12], 512
    $region65: #{tpu_custom_call.1} parent=1 // pred_fallthru
      _
    %v132 = vld [vmem:[#allocation2] sm:$0xff]
    %v133 = vld [vmem:[#allocation2 + $0x8] sm:$0xff]
    %v134 = vld [vmem:[#allocation5] sm:$0xff]
    %v135 = vld [vmem:[#allocation5 + $0x8] sm:$0xff]
    %v136 = vld [vmem:[#allocation7] sm:$0xff]
    %v137 = vld [vmem:[#allocation7 + $0x8] sm:$0xff]
    %v138 = vld [vmem:[#allocation10] sm:$0xff]
    %v139 = vld [vmem:[#allocation10 + $0x8] sm:$0xff]
    %v140 = vld [vmem:[#allocation10 + $0x10] sm:$0xff]
    %v141 = vld [vmem:[#allocation10 + $0x18] sm:$0xff]
    %vm142 = vcmask 261120
    %v144 = vsel %vm142, %v132, 0
    %v147 = vsel %vm142, %v133, 0
    %149 = vmatprep.subr.mxu0 0.0
    %150 = vmatpush1.msra.mxu0 0.0
    %151 = vmatprep.subr.mxu0 0.0
    %152 = vmatpush1.msra.mxu0 0.0
    %153 = vmatprep.subr.mxu0 0.0
    %154 = vmatpush1.msra.mxu0 0.0
    %155 = vmatprep.subr.mxu0 0.0
    %156 = vmatpush1.msra.mxu0 0.0
    %157 = vmatprep.subr.mxu0 0.0
    %158 = vmatpush1.msra.mxu0 0.0
    %159 = vmatprep.subr.mxu0 0.0
    %160 = vmatpush1.msra.mxu0 0.0
    %161 = vmatprep.subr.mxu0 0.0
    %162 = vmatpush1.msra.mxu0 0.0
    %163 = vmatprep.subr.mxu0 0.0
    %164 = vmatpush1.msra.mxu0 0.0
    %165 = vmatprep.subr.mxu0 0.0
    %166 = vmatpush1.msra.mxu0 0.0
    %167 = vmatprep.subr.mxu0 0.0
    %168 = vmatpush1.msra.mxu0 0.0
    %169 = vmatprep.subr.mxu0 0.0
    %170 = vmatpush1.msra.mxu0 0.0
    %171 = vmatprep.subr.mxu0 0.0
    %172 = vmatpush1.msra.mxu0 0.0
    %173 = vmatprep.subr.mxu0 0.0
    %174 = vmatpush1.msra.mxu0 %v141
    %175 = vmatprep.subr.mxu0 0.0
    %176 = vmatpush1.msra.mxu0 %v140
    %177 = vmatprep.subr.mxu0 0.0
    %178 = vmatpush1.msra.mxu0 %v139
    %179 = vmatprep.subr.mxu0 0.0
    %180 = vmatpush1.msra.mxu0 %v138
    %181 = vmatprep.subr.mxu0 0.0
    %182 = vmatpush2.msra.mxu0 0.0
    %183 = vmatprep.subr.mxu0 0.0
    %184 = vmatpush2.msra.mxu0 0.0
    %185 = vmatprep.subr.mxu0 0.0
    %186 = vmatpush2.msra.mxu0 0.0
    %187 = vmatprep.subr.mxu0 0.0
    %188 = vmatpush2.msra.mxu0 0.0
    %189 = vmatprep.subr.mxu0 0.0
    %190 = vmatpush2.msra.mxu0 0.0
    %191 = vmatprep.subr.mxu0 0.0
    %192 = vmatpush2.msra.mxu0 0.0
    %193 = vmatprep.subr.mxu0 0.0
    %194 = vmatpush2.msra.mxu0 0.0
    %195 = vmatprep.subr.mxu0 0.0
    %196 = vmatpush2.msra.mxu0 0.0
    %197 = vmatprep.subr.mxu0 0.0
    %198 = vmatpush2.msra.mxu0 0.0
    %199 = vmatprep.subr.mxu0 0.0
    %200 = vmatpush2.msra.mxu0 0.0
    %201 = vmatprep.subr.mxu0 0.0
    %202 = vmatpush2.msra.mxu0 0.0
    %203 = vmatprep.subr.mxu0 0.0
    %204 = vmatpush2.msra.mxu0 0.0
    %205 = vmatprep.subr.mxu0 0.0
    %206 = vmatpush2.msra.mxu0 0.0
    %207 = vmatprep.subr.mxu0 0.0
    %208 = vmatpush2.msra.mxu0 0.0
    %209 = vmatprep.subr.mxu0 0.0
    %210 = vmatpush2.msra.mxu0 0.0
    %211 = vmatprep.subr.mxu0 0.0
    %212 = vmatpush2.msra.mxu0 0.0
    %213 = vmatprep.mubr.f32.mxu0 0.0
    %214 = vmatmul.mubr.f32.gmra.mxu0 %v144
    %v215 = vpop.f32.mrf.mxu0
    %v216 = vadd.f32 0.0, %v215
    %v217 = vpop.f32.mrf.mxu0
    %218 = vmatprep.mubr.f32.mxu0 0.0
    %219 = vmatmul.mubr.f32.gmra.mxu0 %v147
    %v220 = vpop.f32.mrf.mxu0
    %v221 = vadd.f32 0.0, %v220
    %v222 = vpop.f32.mrf.mxu0
    %223 = vdwg.mxu0
    %v224 = vld [vmem:[#allocation11] sm:$0xff]
    %v225 = vld [vmem:[#allocation11 + $0x8] sm:$0xff]
    %v226 = vld [vmem:[#allocation11 + $0x10] sm:$0xff]
    %v227 = vld [vmem:[#allocation11 + $0x18] sm:$0xff]
    %v229 = vsel %vm142, %v134, 0
    %v232 = vsel %vm142, %v135, 0
    %234 = vmatprep.subr.mxu0 0.0
    %235 = vmatpush1.msra.mxu0 0.0
    %236 = vmatprep.subr.mxu0 0.0
    %237 = vmatpush1.msra.mxu0 0.0
    %238 = vmatprep.subr.mxu0 0.0
    %239 = vmatpush1.msra.mxu0 0.0
    %240 = vmatprep.subr.mxu0 0.0
    %241 = vmatpush1.msra.mxu0 0.0
    %242 = vmatprep.subr.mxu0 0.0
    %243 = vmatpush1.msra.mxu0 0.0
    %244 = vmatprep.subr.mxu0 0.0
    %245 = vmatpush1.msra.mxu0 0.0
    %246 = vmatprep.subr.mxu0 0.0
    %247 = vmatpush1.msra.mxu0 0.0
    %248 = vmatprep.subr.mxu0 0.0
    %249 = vmatpush1.msra.mxu0 0.0
    %250 = vmatprep.subr.mxu0 0.0
    %251 = vmatpush1.msra.mxu0 0.0
    %252 = vmatprep.subr.mxu0 0.0
    %253 = vmatpush1.msra.mxu0 0.0
    %254 = vmatprep.subr.mxu0 0.0
    %255 = vmatpush1.msra.mxu0 0.0
    %256 = vmatprep.subr.mxu0 0.0
    %257 = vmatpush1.msra.mxu0 0.0
    %258 = vmatprep.subr.mxu0 0.0
    %259 = vmatpush1.msra.mxu0 %v227
    %260 = vmatprep.subr.mxu0 0.0
    %261 = vmatpush1.msra.mxu0 %v226
    %262 = vmatprep.subr.mxu0 0.0
    %263 = vmatpush1.msra.mxu0 %v225
    %264 = vmatprep.subr.mxu0 0.0
    %265 = vmatpush1.msra.mxu0 %v224
    %266 = vmatprep.subr.mxu0 0.0
    %267 = vmatpush2.msra.mxu0 0.0
    %268 = vmatprep.subr.mxu0 0.0
    %269 = vmatpush2.msra.mxu0 0.0
    %270 = vmatprep.subr.mxu0 0.0
    %271 = vmatpush2.msra.mxu0 0.0
    %272 = vmatprep.subr.mxu0 0.0
    %273 = vmatpush2.msra.mxu0 0.0
    %274 = vmatprep.subr.mxu0 0.0
    %275 = vmatpush2.msra.mxu0 0.0
    %276 = vmatprep.subr.mxu0 0.0
    %277 = vmatpush2.msra.mxu0 0.0
    %278 = vmatprep.subr.mxu0 0.0
    %279 = vmatpush2.msra.mxu0 0.0
    %280 = vmatprep.subr.mxu0 0.0
    %281 = vmatpush2.msra.mxu0 0.0
    %282 = vmatprep.subr.mxu0 0.0
    %283 = vmatpush2.msra.mxu0 0.0
    %284 = vmatprep.subr.mxu0 0.0
    %285 = vmatpush2.msra.mxu0 0.0
    %286 = vmatprep.subr.mxu0 0.0
    %287 = vmatpush2.msra.mxu0 0.0
    %288 = vmatprep.subr.mxu0 0.0
    %289 = vmatpush2.msra.mxu0 0.0
    %290 = vmatprep.subr.mxu0 0.0
    %291 = vmatpush2.msra.mxu0 0.0
    %292 = vmatprep.subr.mxu0 0.0
    %293 = vmatpush2.msra.mxu0 0.0
    %294 = vmatprep.subr.mxu0 0.0
    %295 = vmatpush2.msra.mxu0 0.0
    %296 = vmatprep.subr.mxu0 0.0
    %297 = vmatpush2.msra.mxu0 0.0
    %298 = vmatprep.mubr.f32.mxu0 0.0
    %299 = vmatmul.mubr.f32.gmra.mxu0 %v229
    %v300 = vpop.f32.mrf.mxu0
    %v301 = vadd.f32 0.0, %v300
    %v302 = vpop.f32.mrf.mxu0
    %303 = vmatprep.mubr.f32.mxu0 0.0
    %304 = vmatmul.mubr.f32.gmra.mxu0 %v232
    %v305 = vpop.f32.mrf.mxu0
    %v306 = vadd.f32 0.0, %v305
    %v307 = vpop.f32.mrf.mxu0
    %308 = vdwg.mxu0
    %vm309 = vcmask 523264
    %310 = vst.msk [vmem:[#allocation15] sm:$0xff] %vm309, %v301
    %311 = vst.msk [vmem:[#allocation15 + $0x8] sm:$0xff] %vm309, %v306
    %v312 = vld [vmem:[#allocation8] sm:$0xff]
    %v313 = vld [vmem:[#allocation8 + $0x8] sm:$0xff]
    %vm314 = vcmp.ne.s32.totalorder %v312, 0
    %vm315 = vcmp.ne.s32.totalorder %v313, 0
    %vm316 = vcmask 130048
    %v318 = vsel %vm316, %v216, 0
    %v321 = vsel %vm316, %v136, 0
    %v324 = vsel %vm316, %v301, 0
    %326 = vmatprep.subr.mxu0 0.0
    %327 = vmatpush1.xpose.msra.mxu0 0.0
    %328 = vmatprep.subr.mxu0 0.0
    %329 = vmatpush1.xpose.msra.mxu0 0.0
    %330 = vmatprep.subr.mxu0 0.0
    %331 = vmatpush1.xpose.msra.mxu0 0.0
    %332 = vmatprep.subr.mxu0 0.0
    %333 = vmatpush1.xpose.msra.mxu0 0.0
    %334 = vmatprep.subr.mxu0 0.0
    %335 = vmatpush1.xpose.msra.mxu0 0.0
    %336 = vmatprep.subr.mxu0 0.0
    %337 = vmatpush1.xpose.msra.mxu0 0.0
    %338 = vmatprep.subr.mxu0 0.0
    %339 = vmatpush1.xpose.msra.mxu0 0.0
    %340 = vmatprep.subr.mxu0 0.0
    %341 = vmatpush1.xpose.msra.mxu0 0.0
    %342 = vmatprep.subr.mxu0 0.0
    %343 = vmatpush1.xpose.msra.mxu0 0.0
    %344 = vmatprep.subr.mxu0 0.0
    %345 = vmatpush1.xpose.msra.mxu0 0.0
    %346 = vmatprep.subr.mxu0 0.0
    %347 = vmatpush1.xpose.msra.mxu0 0.0
    %348 = vmatprep.subr.mxu0 0.0
    %349 = vmatpush1.xpose.msra.mxu0 0.0
    %350 = vmatprep.subr.mxu0 0.0
    %351 = vmatpush1.xpose.msra.mxu0 0.0
    %352 = vmatprep.subr.mxu0 0.0
    %353 = vmatpush1.xpose.msra.mxu0 0.0
    %354 = vmatprep.subr.mxu0 0.0
    %355 = vmatpush1.xpose.msra.mxu0 %v324
    %356 = vmatprep.subr.mxu0 0.0
    %357 = vmatpush1.xpose.msra.mxu0 %v321
    %358 = vmatprep.subr.mxu0 0.0
    %359 = vmatpush2.xpose.msra.mxu0 0.0
    %360 = vmatprep.subr.mxu0 0.0
    %361 = vmatpush2.xpose.msra.mxu0 0.0
    %362 = vmatprep.subr.mxu0 0.0
    %363 = vmatpush2.xpose.msra.mxu0 0.0
    %364 = vmatprep.subr.mxu0 0.0
    %365 = vmatpush2.xpose.msra.mxu0 0.0
    %366 = vmatprep.subr.mxu0 0.0
    %367 = vmatpush2.xpose.msra.mxu0 0.0
    %368 = vmatprep.subr.mxu0 0.0
    %369 = vmatpush2.xpose.msra.mxu0 0.0
    %370 = vmatprep.subr.mxu0 0.0
    %371 = vmatpush2.xpose.msra.mxu0 0.0
    %372 = vmatprep.subr.mxu0 0.0
    %373 = vmatpush2.xpose.msra.mxu0 0.0
    %374 = vmatprep.subr.mxu0 0.0
    %375 = vmatpush2.xpose.msra.mxu0 0.0
    %376 = vmatprep.subr.mxu0 0.0
    %377 = vmatpush2.xpose.msra.mxu0 0.0
    %378 = vmatprep.subr.mxu0 0.0
    %379 = vmatpush2.xpose.msra.mxu0 0.0
    %380 = vmatprep.subr.mxu0 0.0
    %381 = vmatpush2.xpose.msra.mxu0 0.0
    %382 = vmatprep.subr.mxu0 0.0
    %383 = vmatpush2.xpose.msra.mxu0 0.0
    %384 = vmatprep.subr.mxu0 0.0
    %385 = vmatpush2.xpose.msra.mxu0 0.0
    %386 = vmatprep.subr.mxu0 0.0
    %387 = vmatpush2.xpose.msra.mxu0 0.0
    %388 = vmatprep.subr.mxu0 0.0
    %389 = vmatpush2.xpose.msra.mxu0 0.0
    %390 = vmatprep.mubr.f32.mxu0 0.0
    %391 = vmatmul.mubr.f32.gmra.mxu0 %v318
    %v392 = vpop.f32.mrf.mxu0
    %v393 = vadd.f32 0.0, %v392
    %v394 = vpop.f32.mrf.mxu0
    %395 = vdwg.mxu0
    %v397 = vsel %vm316, %v221, 0
    %v400 = vsel %vm316, %v137, 0
    %v403 = vsel %vm316, %v306, 0
    %405 = vmatprep.subr.mxu0 0.0
    %406 = vmatpush1.xpose.msra.mxu0 0.0
    %407 = vmatprep.subr.mxu0 0.0
    %408 = vmatpush1.xpose.msra.mxu0 0.0
    %409 = vmatprep.subr.mxu0 0.0
    %410 = vmatpush1.xpose.msra.mxu0 0.0
    %411 = vmatprep.subr.mxu0 0.0
    %412 = vmatpush1.xpose.msra.mxu0 0.0
    %413 = vmatprep.subr.mxu0 0.0
    %414 = vmatpush1.xpose.msra.mxu0 0.0
    %415 = vmatprep.subr.mxu0 0.0
    %416 = vmatpush1.xpose.msra.mxu0 0.0
    %417 = vmatprep.subr.mxu0 0.0
    %418 = vmatpush1.xpose.msra.mxu0 0.0
    %419 = vmatprep.subr.mxu0 0.0
    %420 = vmatpush1.xpose.msra.mxu0 0.0
    %421 = vmatprep.subr.mxu0 0.0
    %422 = vmatpush1.xpose.msra.mxu0 0.0
    %423 = vmatprep.subr.mxu0 0.0
    %424 = vmatpush1.xpose.msra.mxu0 0.0
    %425 = vmatprep.subr.mxu0 0.0
    %426 = vmatpush1.xpose.msra.mxu0 0.0
    %427 = vmatprep.subr.mxu0 0.0
    %428 = vmatpush1.xpose.msra.mxu0 0.0
    %429 = vmatprep.subr.mxu0 0.0
    %430 = vmatpush1.xpose.msra.mxu0 0.0
    %431 = vmatprep.subr.mxu0 0.0
    %432 = vmatpush1.xpose.msra.mxu0 0.0
    %433 = vmatprep.subr.mxu0 0.0
    %434 = vmatpush1.xpose.msra.mxu0 %v403
    %435 = vmatprep.subr.mxu0 0.0
    %436 = vmatpush1.xpose.msra.mxu0 %v400
    %437 = vmatprep.subr.mxu0 0.0
    %438 = vmatpush2.xpose.msra.mxu0 0.0
    %439 = vmatprep.subr.mxu0 0.0
    %440 = vmatpush2.xpose.msra.mxu0 0.0
    %441 = vmatprep.subr.mxu0 0.0
    %442 = vmatpush2.xpose.msra.mxu0 0.0
    %443 = vmatprep.subr.mxu0 0.0
    %444 = vmatpush2.xpose.msra.mxu0 0.0
    %445 = vmatprep.subr.mxu0 0.0
    %446 = vmatpush2.xpose.msra.mxu0 0.0
    %447 = vmatprep.subr.mxu0 0.0
    %448 = vmatpush2.xpose.msra.mxu0 0.0
    %449 = vmatprep.subr.mxu0 0.0
    %450 = vmatpush2.xpose.msra.mxu0 0.0
    %451 = vmatprep.subr.mxu0 0.0
    %452 = vmatpush2.xpose.msra.mxu0 0.0
    %453 = vmatprep.subr.mxu0 0.0
    %454 = vmatpush2.xpose.msra.mxu0 0.0
    %455 = vmatprep.subr.mxu0 0.0
    %456 = vmatpush2.xpose.msra.mxu0 0.0
    %457 = vmatprep.subr.mxu0 0.0
    %458 = vmatpush2.xpose.msra.mxu0 0.0
    %459 = vmatprep.subr.mxu0 0.0
    %460 = vmatpush2.xpose.msra.mxu0 0.0
    %461 = vmatprep.subr.mxu0 0.0
    %462 = vmatpush2.xpose.msra.mxu0 0.0
    %463 = vmatprep.subr.mxu0 0.0
    %464 = vmatpush2.xpose.msra.mxu0 0.0
    %465 = vmatprep.subr.mxu0 0.0
    %466 = vmatpush2.xpose.msra.mxu0 0.0
    %467 = vmatprep.subr.mxu0 0.0
    %468 = vmatpush2.xpose.msra.mxu0 0.0
    %469 = vmatprep.mubr.f32.mxu0 0.0
    %470 = vmatmul.mubr.f32.gmra.mxu0 %v397
    %v471 = vpop.f32.mrf.mxu0
    %v472 = vadd.f32 0.0, %v471
    %v473 = vpop.f32.mrf.mxu0
    %474 = vdwg.mxu0
    %v475 = vmul.f32 %v393, 0.25
    %v476 = vmul.f32 %v472, 0.25
    %v477 = vsel %vm314, -60000.0, %v475
    %v478 = vsel %vm315, -60000.0, %v476
    %v479 = vsel %vm316, %v477, -inf
    %480 = vmax.xlane.f32.xlu0 %v479
    %v481 = vpop.xlane.xlu0 %480
    %v482 = vsel %vm316, %v478, -inf
    %483 = vmax.xlane.f32.xlu0 %v482
    %v484 = vpop.xlane.xlu0 %483
    %v485 = vsub.f32 %v477, %v481
    %v486 = vsub.f32 %v478, %v484
    %v487 = vmul.f32 %v485, 1.442695
    %v488 = vpow.pop %v487
    %v489 = vmul.f32 %v486, 1.442695
    %v490 = vpow.pop %v489
    %v491 = vsel %vm316, %v488, 0.0
    %492 = vadd.xlane.f32.xlu0 %v491
    %v493 = vpop.xlane.xlu0 %492
    %v494 = vsel %vm316, %v490, 0.0
    %495 = vadd.xlane.f32.xlu0 %v494
    %v496 = vpop.xlane.xlu0 %495
    %v497 = vrcp.pop %v493
    %v498 = vmul.f32 %v488, %v497
    %v499 = vrcp.pop %v496
    %v500 = vmul.f32 %v490, %v499
    %501 = vrot.lane.b32.xlu0 %v136, 96
    %v502 = vpop.permute.xlu0 %501
    %503 = vrot.lane.b32.xlu0 %v301, 96
    %v504 = vpop.permute.xlu0 %503
    %v508 = vsel %vm316, %v498, 0
    %510 = vmatprep.subr.mxu0 0.0
    %511 = vmatpush1.msra.mxu0 0.0
    %512 = vmatprep.subr.mxu0 0.0
    %513 = vmatpush1.msra.mxu0 0.0
    %514 = vmatprep.subr.mxu0 0.0
    %515 = vmatpush1.msra.mxu0 0.0
    %516 = vmatprep.subr.mxu0 0.0
    %517 = vmatpush1.msra.mxu0 0.0
    %518 = vmatprep.subr.mxu0 0.0
    %519 = vmatpush1.msra.mxu0 0.0
    %520 = vmatprep.subr.mxu0 0.0
    %521 = vmatpush1.msra.mxu0 0.0
    %522 = vmatprep.subr.mxu0 0.0
    %523 = vmatpush1.msra.mxu0 0.0
    %524 = vmatprep.subr.mxu0 0.0
    %525 = vmatpush1.msra.mxu0 0.0
    %526 = vmatprep.subr.mxu0 0.0
    %527 = vmatpush1.msra.mxu0 0.0
    %528 = vmatprep.subr.mxu0 0.0
    %529 = vmatpush1.msra.mxu0 0.0
    %530 = vmatprep.subr.mxu0 0.0
    %531 = vmatpush1.msra.mxu0 0.0
    %532 = vmatprep.subr.mxu0 0.0
    %533 = vmatpush1.msra.mxu0 0.0
    %534 = vmatprep.subr.mxu0 0.0
    %535 = vmatpush1.msra.mxu0 0.0
    %536 = vmatprep.subr.mxu0 0.0
    %537 = vmatpush1.msra.mxu0 0.0
    %538 = vmatprep.subr.mxu0 0.0
    %539 = vmatpush1.msra.mxu0 %v504
    %540 = vmatprep.subr.mxu0 0.0
    %541 = vmatpush1.msra.mxu0 %v502
    %542 = vmatprep.subr.mxu0 0.0
    %543 = vmatpush2.msra.mxu0 0.0
    %544 = vmatprep.subr.mxu0 0.0
    %545 = vmatpush2.msra.mxu0 0.0
    %546 = vmatprep.subr.mxu0 0.0
    %547 = vmatpush2.msra.mxu0 0.0
    %548 = vmatprep.subr.mxu0 0.0
    %549 = vmatpush2.msra.mxu0 0.0
    %550 = vmatprep.subr.mxu0 0.0
    %551 = vmatpush2.msra.mxu0 0.0
    %552 = vmatprep.subr.mxu0 0.0
    %553 = vmatpush2.msra.mxu0 0.0
    %554 = vmatprep.subr.mxu0 0.0
    %555 = vmatpush2.msra.mxu0 0.0
    %556 = vmatprep.subr.mxu0 0.0
    %557 = vmatpush2.msra.mxu0 0.0
    %558 = vmatprep.subr.mxu0 0.0
    %559 = vmatpush2.msra.mxu0 0.0
    %560 = vmatprep.subr.mxu0 0.0
    %561 = vmatpush2.msra.mxu0 0.0
    %562 = vmatprep.subr.mxu0 0.0
    %563 = vmatpush2.msra.mxu0 0.0
    %564 = vmatprep.subr.mxu0 0.0
    %565 = vmatpush2.msra.mxu0 0.0
    %566 = vmatprep.subr.mxu0 0.0
    %567 = vmatpush2.msra.mxu0 0.0
    %568 = vmatprep.subr.mxu0 0.0
    %569 = vmatpush2.msra.mxu0 0.0
    %570 = vmatprep.subr.mxu0 0.0
    %571 = vmatpush2.msra.mxu0 0.0
    %572 = vmatprep.subr.mxu0 0.0
    %573 = vmatpush2.msra.mxu0 0.0
    %574 = vmatprep.mubr.f32.mxu0 0.0
    %575 = vmatmul.mubr.f32.gmra.mxu0 %v508
    %v576 = vpop.f32.mrf.mxu0
    %v577 = vadd.f32 0.0, %v576
    %v578 = vpop.f32.mrf.mxu0
    %579 = vdwg.mxu0
    %580 = vrot.lane.b32.xlu0 %v137, 96
    %v581 = vpop.permute.xlu0 %580
    %582 = vrot.lane.b32.xlu0 %v306, 96
    %v583 = vpop.permute.xlu0 %582
    %v587 = vsel %vm316, %v500, 0
    %589 = vmatprep.subr.mxu0 0.0
    %590 = vmatpush1.msra.mxu0 0.0
    %591 = vmatprep.subr.mxu0 0.0
    %592 = vmatpush1.msra.mxu0 0.0
    %593 = vmatprep.subr.mxu0 0.0
    %594 = vmatpush1.msra.mxu0 0.0
    %595 = vmatprep.subr.mxu0 0.0
    %596 = vmatpush1.msra.mxu0 0.0
    %597 = vmatprep.subr.mxu0 0.0
    %598 = vmatpush1.msra.mxu0 0.0
    %599 = vmatprep.subr.mxu0 0.0
    %600 = vmatpush1.msra.mxu0 0.0
    %601 = vmatprep.subr.mxu0 0.0
    %602 = vmatpush1.msra.mxu0 0.0
    %603 = vmatprep.subr.mxu0 0.0
    %604 = vmatpush1.msra.mxu0 0.0
    %605 = vmatprep.subr.mxu0 0.0
    %606 = vmatpush1.msra.mxu0 0.0
    %607 = vmatprep.subr.mxu0 0.0
    %608 = vmatpush1.msra.mxu0 0.0
    %609 = vmatprep.subr.mxu0 0.0
    %610 = vmatpush1.msra.mxu0 0.0
    %611 = vmatprep.subr.mxu0 0.0
    %612 = vmatpush1.msra.mxu0 0.0
    %613 = vmatprep.subr.mxu0 0.0
    %614 = vmatpush1.msra.mxu0 0.0
    %615 = vmatprep.subr.mxu0 0.0
    %616 = vmatpush1.msra.mxu0 0.0
    %617 = vmatprep.subr.mxu0 0.0
    %618 = vmatpush1.msra.mxu0 %v583
    %619 = vmatprep.subr.mxu0 0.0
    %620 = vmatpush1.msra.mxu0 %v581
    %621 = vmatprep.subr.mxu0 0.0
    %622 = vmatpush2.msra.mxu0 0.0
    %623 = vmatprep.subr.mxu0 0.0
    %624 = vmatpush2.msra.mxu0 0.0
    %625 = vmatprep.subr.mxu0 0.0
    %626 = vmatpush2.msra.mxu0 0.0
    %627 = vmatprep.subr.mxu0 0.0
    %628 = vmatpush2.msra.mxu0 0.0
    %629 = vmatprep.subr.mxu0 0.0
    %630 = vmatpush2.msra.mxu0 0.0
    %631 = vmatprep.subr.mxu0 0.0
    %632 = vmatpush2.msra.mxu0 0.0
    %633 = vmatprep.subr.mxu0 0.0
    %634 = vmatpush2.msra.mxu0 0.0
    %635 = vmatprep.subr.mxu0 0.0
    %636 = vmatpush2.msra.mxu0 0.0
    %637 = vmatprep.subr.mxu0 0.0
    %638 = vmatpush2.msra.mxu0 0.0
    %639 = vmatprep.subr.mxu0 0.0
    %640 = vmatpush2.msra.mxu0 0.0
    %641 = vmatprep.subr.mxu0 0.0
    %642 = vmatpush2.msra.mxu0 0.0
    %643 = vmatprep.subr.mxu0 0.0
    %644 = vmatpush2.msra.mxu0 0.0
    %645 = vmatprep.subr.mxu0 0.0
    %646 = vmatpush2.msra.mxu0 0.0
    %647 = vmatprep.subr.mxu0 0.0
    %648 = vmatpush2.msra.mxu0 0.0
    %649 = vmatprep.subr.mxu0 0.0
    %650 = vmatpush2.msra.mxu0 0.0
    %651 = vmatprep.subr.mxu0 0.0
    %652 = vmatpush2.msra.mxu0 0.0
    %653 = vmatprep.mubr.f32.mxu0 0.0
    %654 = vmatmul.mubr.f32.gmra.mxu0 %v587
    %v655 = vpop.f32.mrf.mxu0
    %v656 = vadd.f32 0.0, %v655
    %v657 = vpop.f32.mrf.mxu0
    %658 = vdwg.mxu0
    %659 = vrot.lane.b32.xlu0 %v216, 112
    %v660 = vpop.permute.xlu0 %659
    %661 = vrot.lane.b32.xlu0 %v136, 112
    %v662 = vpop.permute.xlu0 %661
    %663 = vrot.lane.b32.xlu0 %v301, 112
    %v664 = vpop.permute.xlu0 %663
    %v665 = vsel %vm316, %v660, 0
    %v667 = vsel %vm316, %v662, 0
    %v669 = vsel %vm316, %v664, 0
    %671 = vmatprep.subr.mxu0 0.0
    %672 = vmatpush1.xpose.msra.mxu0 0.0
    %673 = vmatprep.subr.mxu0 0.0
    %674 = vmatpush1.xpose.msra.mxu0 0.0
    %675 = vmatprep.subr.mxu0 0.0
    %676 = vmatpush1.xpose.msra.mxu0 0.0
    %677 = vmatprep.subr.mxu0 0.0
    %678 = vmatpush1.xpose.msra.mxu0 0.0
    %679 = vmatprep.subr.mxu0 0.0
    %680 = vmatpush1.xpose.msra.mxu0 0.0
    %681 = vmatprep.subr.mxu0 0.0
    %682 = vmatpush1.xpose.msra.mxu0 0.0
    %683 = vmatprep.subr.mxu0 0.0
    %684 = vmatpush1.xpose.msra.mxu0 0.0
    %685 = vmatprep.subr.mxu0 0.0
    %686 = vmatpush1.xpose.msra.mxu0 0.0
    %687 = vmatprep.subr.mxu0 0.0
    %688 = vmatpush1.xpose.msra.mxu0 0.0
    %689 = vmatprep.subr.mxu0 0.0
    %690 = vmatpush1.xpose.msra.mxu0 0.0
    %691 = vmatprep.subr.mxu0 0.0
    %692 = vmatpush1.xpose.msra.mxu0 0.0
    %693 = vmatprep.subr.mxu0 0.0
    %694 = vmatpush1.xpose.msra.mxu0 0.0
    %695 = vmatprep.subr.mxu0 0.0
    %696 = vmatpush1.xpose.msra.mxu0 0.0
    %697 = vmatprep.subr.mxu0 0.0
    %698 = vmatpush1.xpose.msra.mxu0 0.0
    %699 = vmatprep.subr.mxu0 0.0
    %700 = vmatpush1.xpose.msra.mxu0 %v669
    %701 = vmatprep.subr.mxu0 0.0
    %702 = vmatpush1.xpose.msra.mxu0 %v667
    %703 = vmatprep.subr.mxu0 0.0
    %704 = vmatpush2.xpose.msra.mxu0 0.0
    %705 = vmatprep.subr.mxu0 0.0
    %706 = vmatpush2.xpose.msra.mxu0 0.0
    %707 = vmatprep.subr.mxu0 0.0
    %708 = vmatpush2.xpose.msra.mxu0 0.0
    %709 = vmatprep.subr.mxu0 0.0
    %710 = vmatpush2.xpose.msra.mxu0 0.0
    %711 = vmatprep.subr.mxu0 0.0
    %712 = vmatpush2.xpose.msra.mxu0 0.0
    %713 = vmatprep.subr.mxu0 0.0
    %714 = vmatpush2.xpose.msra.mxu0 0.0
    %715 = vmatprep.subr.mxu0 0.0
    %716 = vmatpush2.xpose.msra.mxu0 0.0
    %717 = vmatprep.subr.mxu0 0.0
    %718 = vmatpush2.xpose.msra.mxu0 0.0
    %719 = vmatprep.subr.mxu0 0.0
    %720 = vmatpush2.xpose.msra.mxu0 0.0
    %721 = vmatprep.subr.mxu0 0.0
    %722 = vmatpush2.xpose.msra.mxu0 0.0
    %723 = vmatprep.subr.mxu0 0.0
    %724 = vmatpush2.xpose.msra.mxu0 0.0
    %725 = vmatprep.subr.mxu0 0.0
    %726 = vmatpush2.xpose.msra.mxu0 0.0
    %727 = vmatprep.subr.mxu0 0.0
    %728 = vmatpush2.xpose.msra.mxu0 0.0
    %729 = vmatprep.subr.mxu0 0.0
    %730 = vmatpush2.xpose.msra.mxu0 0.0
    %731 = vmatprep.subr.mxu0 0.0
    %732 = vmatpush2.xpose.msra.mxu0 0.0
    %733 = vmatprep.subr.mxu0 0.0
    %734 = vmatpush2.xpose.msra.mxu0 0.0
    %735 = vmatprep.mubr.f32.mxu0 0.0
    %736 = vmatmul.mubr.f32.gmra.mxu0 %v665
    %v737 = vpop.f32.mrf.mxu0
    %v738 = vadd.f32 0.0, %v737
    %v739 = vpop.f32.mrf.mxu0
    %740 = vdwg.mxu0
    %741 = vrot.lane.b32.xlu0 %v221, 112
    %v742 = vpop.permute.xlu0 %741
    %743 = vrot.lane.b32.xlu0 %v137, 112
    %v744 = vpop.permute.xlu0 %743
    %745 = vrot.lane.b32.xlu0 %v306, 112
    %v746 = vpop.permute.xlu0 %745
    %v747 = vsel %vm316, %v742, 0
    %v749 = vsel %vm316, %v744, 0
    %v751 = vsel %vm316, %v746, 0
    %753 = vmatprep.subr.mxu0 0.0
    %754 = vmatpush1.xpose.msra.mxu0 0.0
    %755 = vmatprep.subr.mxu0 0.0
    %756 = vmatpush1.xpose.msra.mxu0 0.0
    %757 = vmatprep.subr.mxu0 0.0
    %758 = vmatpush1.xpose.msra.mxu0 0.0
    %759 = vmatprep.subr.mxu0 0.0
    %760 = vmatpush1.xpose.msra.mxu0 0.0
    %761 = vmatprep.subr.mxu0 0.0
    %762 = vmatpush1.xpose.msra.mxu0 0.0
    %763 = vmatprep.subr.mxu0 0.0
    %764 = vmatpush1.xpose.msra.mxu0 0.0
    %765 = vmatprep.subr.mxu0 0.0
    %766 = vmatpush1.xpose.msra.mxu0 0.0
    %767 = vmatprep.subr.mxu0 0.0
    %768 = vmatpush1.xpose.msra.mxu0 0.0
    %769 = vmatprep.subr.mxu0 0.0
    %770 = vmatpush1.xpose.msra.mxu0 0.0
    %771 = vmatprep.subr.mxu0 0.0
    %772 = vmatpush1.xpose.msra.mxu0 0.0
    %773 = vmatprep.subr.mxu0 0.0
    %774 = vmatpush1.xpose.msra.mxu0 0.0
    %775 = vmatprep.subr.mxu0 0.0
    %776 = vmatpush1.xpose.msra.mxu0 0.0
    %777 = vmatprep.subr.mxu0 0.0
    %778 = vmatpush1.xpose.msra.mxu0 0.0
    %779 = vmatprep.subr.mxu0 0.0
    %780 = vmatpush1.xpose.msra.mxu0 0.0
    %781 = vmatprep.subr.mxu0 0.0
    %782 = vmatpush1.xpose.msra.mxu0 %v751
    %783 = vmatprep.subr.mxu0 0.0
    %784 = vmatpush1.xpose.msra.mxu0 %v749
    %785 = vmatprep.subr.mxu0 0.0
    %786 = vmatpush2.xpose.msra.mxu0 0.0
    %787 = vmatprep.subr.mxu0 0.0
    %788 = vmatpush2.xpose.msra.mxu0 0.0
    %789 = vmatprep.subr.mxu0 0.0
    %790 = vmatpush2.xpose.msra.mxu0 0.0
    %791 = vmatprep.subr.mxu0 0.0
    %792 = vmatpush2.xpose.msra.mxu0 0.0
    %793 = vmatprep.subr.mxu0 0.0
    %794 = vmatpush2.xpose.msra.mxu0 0.0
    %795 = vmatprep.subr.mxu0 0.0
    %796 = vmatpush2.xpose.msra.mxu0 0.0
    %797 = vmatprep.subr.mxu0 0.0
    %798 = vmatpush2.xpose.msra.mxu0 0.0
    %799 = vmatprep.subr.mxu0 0.0
    %800 = vmatpush2.xpose.msra.mxu0 0.0
    %801 = vmatprep.subr.mxu0 0.0
    %802 = vmatpush2.xpose.msra.mxu0 0.0
    %803 = vmatprep.subr.mxu0 0.0
    %804 = vmatpush2.xpose.msra.mxu0 0.0
    %805 = vmatprep.subr.mxu0 0.0
    %806 = vmatpush2.xpose.msra.mxu0 0.0
    %807 = vmatprep.subr.mxu0 0.0
    %808 = vmatpush2.xpose.msra.mxu0 0.0
    %809 = vmatprep.subr.mxu0 0.0
    %810 = vmatpush2.xpose.msra.mxu0 0.0
    %811 = vmatprep.subr.mxu0 0.0
    %812 = vmatpush2.xpose.msra.mxu0 0.0
    %813 = vmatprep.subr.mxu0 0.0
    %814 = vmatpush2.xpose.msra.mxu0 0.0
    %815 = vmatprep.subr.mxu0 0.0
    %816 = vmatpush2.xpose.msra.mxu0 0.0
    %817 = vmatprep.mubr.f32.mxu0 0.0
    %818 = vmatmul.mubr.f32.gmra.mxu0 %v747
    %v819 = vpop.f32.mrf.mxu0
    %v820 = vadd.f32 0.0, %v819
    %v821 = vpop.f32.mrf.mxu0
    %822 = vdwg.mxu0
    %v823 = vmul.f32 %v738, 0.25
    %v824 = vmul.f32 %v820, 0.25
    %v825 = vsel %vm314, -60000.0, %v823
    %v826 = vsel %vm315, -60000.0, %v824
    %v827 = vsel %vm316, %v825, -inf
    %828 = vmax.xlane.f32.xlu0 %v827
    %v829 = vpop.xlane.xlu0 %828
    %v830 = vsel %vm316, %v826, -inf
    %831 = vmax.xlane.f32.xlu0 %v830
    %v832 = vpop.xlane.xlu0 %831
    %v833 = vsub.f32 %v825, %v829
    %v834 = vsub.f32 %v826, %v832
    %v835 = vmul.f32 %v833, 1.442695
    %v836 = vpow.pop %v835
    %v837 = vmul.f32 %v834, 1.442695
    %v838 = vpow.pop %v837
    %v839 = vsel %vm316, %v836, 0.0
    %840 = vadd.xlane.f32.xlu0 %v839
    %v841 = vpop.xlane.xlu0 %840
    %v842 = vsel %vm316, %v838, 0.0
    %843 = vadd.xlane.f32.xlu0 %v842
    %v844 = vpop.xlane.xlu0 %843
    %v845 = vrcp.pop %v841
    %v846 = vmul.f32 %v836, %v845
    %v847 = vrcp.pop %v844
    %v848 = vmul.f32 %v838, %v847
    %849 = vrot.lane.b32.xlu0 %v136, 80
    %v850 = vpop.permute.xlu0 %849
    %851 = vrot.lane.b32.xlu0 %v301, 80
    %v852 = vpop.permute.xlu0 %851
    %v856 = vsel %vm316, %v846, 0
    %858 = vmatprep.subr.mxu0 0.0
    %859 = vmatpush1.msra.mxu0 0.0
    %860 = vmatprep.subr.mxu0 0.0
    %861 = vmatpush1.msra.mxu0 0.0
    %862 = vmatprep.subr.mxu0 0.0
    %863 = vmatpush1.msra.mxu0 0.0
    %864 = vmatprep.subr.mxu0 0.0
    %865 = vmatpush1.msra.mxu0 0.0
    %866 = vmatprep.subr.mxu0 0.0
    %867 = vmatpush1.msra.mxu0 0.0
    %868 = vmatprep.subr.mxu0 0.0
    %869 = vmatpush1.msra.mxu0 0.0
    %870 = vmatprep.subr.mxu0 0.0
    %871 = vmatpush1.msra.mxu0 0.0
    %872 = vmatprep.subr.mxu0 0.0
    %873 = vmatpush1.msra.mxu0 0.0
    %874 = vmatprep.subr.mxu0 0.0
    %875 = vmatpush1.msra.mxu0 0.0
    %876 = vmatprep.subr.mxu0 0.0
    %877 = vmatpush1.msra.mxu0 0.0
    %878 = vmatprep.subr.mxu0 0.0
    %879 = vmatpush1.msra.mxu0 0.0
    %880 = vmatprep.subr.mxu0 0.0
    %881 = vmatpush1.msra.mxu0 0.0
    %882 = vmatprep.subr.mxu0 0.0
    %883 = vmatpush1.msra.mxu0 0.0
    %884 = vmatprep.subr.mxu0 0.0
    %885 = vmatpush1.msra.mxu0 0.0
    %886 = vmatprep.subr.mxu0 0.0
    %887 = vmatpush1.msra.mxu0 %v852
    %888 = vmatprep.subr.mxu0 0.0
    %889 = vmatpush1.msra.mxu0 %v850
    %890 = vmatprep.subr.mxu0 0.0
    %891 = vmatpush2.msra.mxu0 0.0
    %892 = vmatprep.subr.mxu0 0.0
    %893 = vmatpush2.msra.mxu0 0.0
    %894 = vmatprep.subr.mxu0 0.0
    %895 = vmatpush2.msra.mxu0 0.0
    %896 = vmatprep.subr.mxu0 0.0
    %897 = vmatpush2.msra.mxu0 0.0
    %898 = vmatprep.subr.mxu0 0.0
    %899 = vmatpush2.msra.mxu0 0.0
    %900 = vmatprep.subr.mxu0 0.0
    %901 = vmatpush2.msra.mxu0 0.0
    %902 = vmatprep.subr.mxu0 0.0
    %903 = vmatpush2.msra.mxu0 0.0
    %904 = vmatprep.subr.mxu0 0.0
    %905 = vmatpush2.msra.mxu0 0.0
    %906 = vmatprep.subr.mxu0 0.0
    %907 = vmatpush2.msra.mxu0 0.0
    %908 = vmatprep.subr.mxu0 0.0
    %909 = vmatpush2.msra.mxu0 0.0
    %910 = vmatprep.subr.mxu0 0.0
    %911 = vmatpush2.msra.mxu0 0.0
    %912 = vmatprep.subr.mxu0 0.0
    %913 = vmatpush2.msra.mxu0 0.0
    %914 = vmatprep.subr.mxu0 0.0
    %915 = vmatpush2.msra.mxu0 0.0
    %916 = vmatprep.subr.mxu0 0.0
    %917 = vmatpush2.msra.mxu0 0.0
    %918 = vmatprep.subr.mxu0 0.0
    %919 = vmatpush2.msra.mxu0 0.0
    %920 = vmatprep.subr.mxu0 0.0
    %921 = vmatpush2.msra.mxu0 0.0
    %922 = vmatprep.mubr.f32.mxu0 0.0
    %923 = vmatmul.mubr.f32.gmra.mxu0 %v856
    %v924 = vpop.f32.mrf.mxu0
    %v925 = vadd.f32 0.0, %v924
    %v926 = vpop.f32.mrf.mxu0
    %927 = vdwg.mxu0
    %928 = vrot.lane.b32.xlu0 %v137, 80
    %v929 = vpop.permute.xlu0 %928
    %930 = vrot.lane.b32.xlu0 %v306, 80
    %v931 = vpop.permute.xlu0 %930
    %v935 = vsel %vm316, %v848, 0
    %937 = vmatprep.subr.mxu0 0.0
    %938 = vmatpush1.msra.mxu0 0.0
    %939 = vmatprep.subr.mxu0 0.0
    %940 = vmatpush1.msra.mxu0 0.0
    %941 = vmatprep.subr.mxu0 0.0
    %942 = vmatpush1.msra.mxu0 0.0
    %943 = vmatprep.subr.mxu0 0.0
    %944 = vmatpush1.msra.mxu0 0.0
    %945 = vmatprep.subr.mxu0 0.0
    %946 = vmatpush1.msra.mxu0 0.0
    %947 = vmatprep.subr.mxu0 0.0
    %948 = vmatpush1.msra.mxu0 0.0
    %949 = vmatprep.subr.mxu0 0.0
    %950 = vmatpush1.msra.mxu0 0.0
    %951 = vmatprep.subr.mxu0 0.0
    %952 = vmatpush1.msra.mxu0 0.0
    %953 = vmatprep.subr.mxu0 0.0
    %954 = vmatpush1.msra.mxu0 0.0
    %955 = vmatprep.subr.mxu0 0.0
    %956 = vmatpush1.msra.mxu0 0.0
    %957 = vmatprep.subr.mxu0 0.0
    %958 = vmatpush1.msra.mxu0 0.0
    %959 = vmatprep.subr.mxu0 0.0
    %960 = vmatpush1.msra.mxu0 0.0
    %961 = vmatprep.subr.mxu0 0.0
    %962 = vmatpush1.msra.mxu0 0.0
    %963 = vmatprep.subr.mxu0 0.0
    %964 = vmatpush1.msra.mxu0 0.0
    %965 = vmatprep.subr.mxu0 0.0
    %966 = vmatpush1.msra.mxu0 %v931
    %967 = vmatprep.subr.mxu0 0.0
    %968 = vmatpush1.msra.mxu0 %v929
    %969 = vmatprep.subr.mxu0 0.0
    %970 = vmatpush2.msra.mxu0 0.0
    %971 = vmatprep.subr.mxu0 0.0
    %972 = vmatpush2.msra.mxu0 0.0
    %973 = vmatprep.subr.mxu0 0.0
    %974 = vmatpush2.msra.mxu0 0.0
    %975 = vmatprep.subr.mxu0 0.0
    %976 = vmatpush2.msra.mxu0 0.0
    %977 = vmatprep.subr.mxu0 0.0
    %978 = vmatpush2.msra.mxu0 0.0
    %979 = vmatprep.subr.mxu0 0.0
    %980 = vmatpush2.msra.mxu0 0.0
    %981 = vmatprep.subr.mxu0 0.0
    %982 = vmatpush2.msra.mxu0 0.0
    %983 = vmatprep.subr.mxu0 0.0
    %984 = vmatpush2.msra.mxu0 0.0
    %985 = vmatprep.subr.mxu0 0.0
    %986 = vmatpush2.msra.mxu0 0.0
    %987 = vmatprep.subr.mxu0 0.0
    %988 = vmatpush2.msra.mxu0 0.0
    %989 = vmatprep.subr.mxu0 0.0
    %990 = vmatpush2.msra.mxu0 0.0
    %991 = vmatprep.subr.mxu0 0.0
    %992 = vmatpush2.msra.mxu0 0.0
    %993 = vmatprep.subr.mxu0 0.0
    %994 = vmatpush2.msra.mxu0 0.0
    %995 = vmatprep.subr.mxu0 0.0
    %996 = vmatpush2.msra.mxu0 0.0
    %997 = vmatprep.subr.mxu0 0.0
    %998 = vmatpush2.msra.mxu0 0.0
    %999 = vmatprep.subr.mxu0 0.0
    %1000 = vmatpush2.msra.mxu0 0.0
    %1001 = vmatprep.mubr.f32.mxu0 0.0
    %1002 = vmatmul.mubr.f32.gmra.mxu0 %v935
    %v1003 = vpop.f32.mrf.mxu0
    %v1004 = vadd.f32 0.0, %v1003
    %v1005 = vpop.f32.mrf.mxu0
    %1006 = vdwg.mxu0
    %1009 = vrot.lane.b32.xlu0 %v825, 16
    %v1010 = vpop.permute.xlu0 %1009
    %1011 = vrot.lane.b32.xlu0 %v826, 16
    %v1012 = vpop.permute.xlu0 %1011
    %v1015 = vsel %vm316, %v477, %v1010
    %v1016 = vsel %vm316, %v478, %v1012
    %1017 = vst.msk [vmem:[#allocation17] sm:$0xff] %vm142, %v1015
    %1018 = vst.msk [vmem:[#allocation17 + $0x8] sm:$0xff] %vm142, %v1016
    %1021 = vrot.lane.b32.xlu0 %v925, 16
    %v1022 = vpop.permute.xlu0 %1021
    %1023 = vrot.lane.b32.xlu0 %v1004, 16
    %v1024 = vpop.permute.xlu0 %1023
    %v1027 = vsel %vm316, %v577, %v1022
    %v1028 = vsel %vm316, %v656, %v1024
    %v1029 = vld [vmem:[#allocation13] sm:$0xff]
    %v1030 = vld [vmem:[#allocation13 + $0x8] sm:$0xff]
    %v1031 = vld [vmem:[#allocation13 + $0x10] sm:$0xff]
    %v1032 = vld [vmem:[#allocation13 + $0x18] sm:$0xff]
    %v1034 = vsel %vm142, %v1027, 0
    %v1037 = vsel %vm142, %v1028, 0
    %1039 = vmatprep.subr.mxu0 0.0
    %1040 = vmatpush1.msra.mxu0 0.0
    %1041 = vmatprep.subr.mxu0 0.0
    %1042 = vmatpush1.msra.mxu0 0.0
    %1043 = vmatprep.subr.mxu0 0.0
    %1044 = vmatpush1.msra.mxu0 0.0
    %1045 = vmatprep.subr.mxu0 0.0
    %1046 = vmatpush1.msra.mxu0 0.0
    %1047 = vmatprep.subr.mxu0 0.0
    %1048 = vmatpush1.msra.mxu0 0.0
    %1049 = vmatprep.subr.mxu0 0.0
    %1050 = vmatpush1.msra.mxu0 0.0
    %1051 = vmatprep.subr.mxu0 0.0
    %1052 = vmatpush1.msra.mxu0 0.0
    %1053 = vmatprep.subr.mxu0 0.0
    %1054 = vmatpush1.msra.mxu0 0.0
    %1055 = vmatprep.subr.mxu0 0.0
    %1056 = vmatpush1.msra.mxu0 0.0
    %1057 = vmatprep.subr.mxu0 0.0
    %1058 = vmatpush1.msra.mxu0 0.0
    %1059 = vmatprep.subr.mxu0 0.0
    %1060 = vmatpush1.msra.mxu0 0.0
    %1061 = vmatprep.subr.mxu0 0.0
    %1062 = vmatpush1.msra.mxu0 0.0
    %1063 = vmatprep.subr.mxu0 0.0
    %1064 = vmatpush1.msra.mxu0 %v1032
    %1065 = vmatprep.subr.mxu0 0.0
    %1066 = vmatpush1.msra.mxu0 %v1031
    %1067 = vmatprep.subr.mxu0 0.0
    %1068 = vmatpush1.msra.mxu0 %v1030
    %1069 = vmatprep.subr.mxu0 0.0
    %1070 = vmatpush1.msra.mxu0 %v1029
    %1071 = vmatprep.subr.mxu0 0.0
    %1072 = vmatpush2.msra.mxu0 0.0
    %1073 = vmatprep.subr.mxu0 0.0
    %1074 = vmatpush2.msra.mxu0 0.0
    %1075 = vmatprep.subr.mxu0 0.0
    %1076 = vmatpush2.msra.mxu0 0.0
    %1077 = vmatprep.subr.mxu0 0.0
    %1078 = vmatpush2.msra.mxu0 0.0
    %1079 = vmatprep.subr.mxu0 0.0
    %1080 = vmatpush2.msra.mxu0 0.0
    %1081 = vmatprep.subr.mxu0 0.0
    %1082 = vmatpush2.msra.mxu0 0.0
    %1083 = vmatprep.subr.mxu0 0.0
    %1084 = vmatpush2.msra.mxu0 0.0
    %1085 = vmatprep.subr.mxu0 0.0
    %1086 = vmatpush2.msra.mxu0 0.0
    %1087 = vmatprep.subr.mxu0 0.0
    %1088 = vmatpush2.msra.mxu0 0.0
    %1089 = vmatprep.subr.mxu0 0.0
    %1090 = vmatpush2.msra.mxu0 0.0
    %1091 = vmatprep.subr.mxu0 0.0
    %1092 = vmatpush2.msra.mxu0 0.0
    %1093 = vmatprep.subr.mxu0 0.0
    %1094 = vmatpush2.msra.mxu0 0.0
    %1095 = vmatprep.subr.mxu0 0.0
    %1096 = vmatpush2.msra.mxu0 0.0
    %1097 = vmatprep.subr.mxu0 0.0
    %1098 = vmatpush2.msra.mxu0 0.0
    %1099 = vmatprep.subr.mxu0 0.0
    %1100 = vmatpush2.msra.mxu0 0.0
    %1101 = vmatprep.subr.mxu0 0.0
    %1102 = vmatpush2.msra.mxu0 0.0
    %1103 = vmatprep.mubr.f32.mxu0 0.0
    %1104 = vmatmul.mubr.f32.gmra.mxu0 %v1034
    %v1105 = vpop.f32.mrf.mxu0
    %v1106 = vadd.f32 0.0, %v1105
    %v1107 = vpop.f32.mrf.mxu0
    %1108 = vmatprep.mubr.f32.mxu0 0.0
    %1109 = vmatmul.mubr.f32.gmra.mxu0 %v1037
    %v1110 = vpop.f32.mrf.mxu0
    %v1111 = vadd.f32 0.0, %v1110
    %v1112 = vpop.f32.mrf.mxu0
    %1113 = vdwg.mxu0
    %v1114 = vadd.f32 %v1106, %v216
    %v1115 = vadd.f32 %v1111, %v221
    %v1116 = vsel %vm142, %v1114, 0.0
    %1117 = vadd.xlane.f32.xlu0 %v1116
    %v1118 = vpop.xlane.xlu0 %1117
    %v1119 = vsel %vm142, %v1115, 0.0
    %1120 = vadd.xlane.f32.xlu0 %v1119
    %v1121 = vpop.xlane.xlu0 %1120
    %v1122 = vrcp.pop 32.0
    %v1123 = vmul.f32 %v1118, %v1122
    %v1124 = vmul.f32 %v1121, %v1122
    %v1125 = vsub.f32 %v1114, %v1123
    %v1126 = vsub.f32 %v1115, %v1124
    %v1127 = vmul.f32 %v1125, %v1125
    %v1128 = vmul.f32 %v1126, %v1126
    %v1129 = vsel %vm142, %v1127, 0.0
    %1130 = vadd.xlane.f32.xlu0 %v1129
    %v1131 = vpop.xlane.xlu0 %1130
    %v1132 = vsel %vm142, %v1128, 0.0
    %1133 = vadd.xlane.f32.xlu0 %v1132
    %v1134 = vpop.xlane.xlu0 %1133
    %v1135 = vmul.f32 %v1131, %v1122
    %v1136 = vmul.f32 %v1134, %v1122
    %v1137 = vadd.f32 %v1135, 1e-05
    %v1138 = vadd.f32 %v1136, 1e-05
    %v1139 = vrsqrt.pop %v1137
    %v1140 = vrsqrt.pop %v1138
    %v1141 = vmul.f32 %v1125, %v1139
    %v1142 = vmul.f32 %v1126, %v1140
    %v1143 = vld [vmem:[%s7] sm:$0x1]
    %v1145 = vlaneseq
    %v1146 = vshrl.u32 %v1145, 7
    %v1147 = vsub.s32 0, %v1146
    %v1148 = vrot.slane %v1143, %v1147
    %v1150 = vmul.f32 %v1141, %v1148
    %v1151 = vmul.f32 %v1142, %v1148
    %v1152 = vld [vmem:[%s8] sm:$0x1]
    %v1154 = vlaneseq
    %v1155 = vshrl.u32 %v1154, 7
    %v1156 = vsub.s32 0, %v1155
    %v1157 = vrot.slane %v1152, %v1156
    %v1159 = vadd.f32 %v1150, %v1157
    %v1160 = vadd.f32 %v1151, %v1157
    %1161 = vst.msk [vmem:[#allocation14] sm:$0xff] %vm142, %v1159
    %1162 = vst.msk [vmem:[#allocation14 + $0x8] sm:$0xff] %vm142, %v1160
    // Predicated region
    $region66: #{tpu_custom_call.1} parent=1 // pred_check
      _
    $region67: #{tpu_custom_call.1} parent=1 // pred_check_branch
      %1164 = sbr.rel (0) target = $region69
    $region68: #{tpu_custom_call.1} parent=1 // pred_region
      %s1166 = ssub.s32 256, 256
      %1167 = vsyncadd [#allocation4], %s1166
      %s1168 = sshll.u32 [#allocation14], 4
      %s1169 = int_to_ptr.vmem [resolvable:$true] %s1168
      %1174 = dma.vmem_to_hbm [thread:$0]  %s1169, 256, %s9, [#allocation4], 128, 128, 8
    $region69: #{tpu_custom_call.1} parent=1 // pred_fallthru
      _
    // Predicated region
    $region70: #{tpu_custom_call.1} parent=1 // pred_check
      _
    $region71: #{tpu_custom_call.1} parent=1 // pred_check_branch
      %1176 = sbr.rel (0) target = $region73
    $region72: #{tpu_custom_call.1} parent=1 // pred_region
      %s1178 = ssub.s32 256, 256
      %1179 = vsyncadd [#allocation16], %s1178
      %s1180 = sshll.u32 [#allocation15], 4
      %s1181 = int_to_ptr.vmem [resolvable:$true] %s1180
      %1186 = dma.vmem_to_hbm [thread:$0]  %s1181, 256, %s10, [#allocation16], 128, 128, 8
    $region73: #{tpu_custom_call.1} parent=1 // pred_fallthru
      _
    // Predicated region
    $region74: #{tpu_custom_call.1} parent=1 // pred_check
      _
    $region75: #{tpu_custom_call.1} parent=1 // pred_check_branch
      %1188 = sbr.rel (0) target = $region77
    $region76: #{tpu_custom_call.1} parent=1 // pred_region
      %s1190 = ssub.s32 256, 256
      %1191 = vsyncadd [#allocation16], %s1190
      %s1192 = sshll.u32 [#allocation17], 4
      %s1193 = int_to_ptr.vmem [resolvable:$true] %s1192
      %1198 = dma.vmem_to_hbm [thread:$0]  %s1193, 256, %s11, [#allocation16], 128, 128, 8
    $region77: #{tpu_custom_call.1} parent=1 // pred_fallthru
      _
    // Predicated region
    $region78: #{tpu_custom_call.1} parent=1 // pred_check
      _
    $region79: #{tpu_custom_call.1} parent=1 // pred_check_branch
      %1200 = sbr.rel (0) target = $region81
    $region80: #{tpu_custom_call.1} parent=1 // pred_region
      %1201 = dma.done [#allocation4], 256
    $region81: #{tpu_custom_call.1} parent=1 // pred_fallthru
      _
    // Predicated region
    $region82: #{tpu_custom_call.1} parent=1 // pred_check
      _
    $region83: #{tpu_custom_call.1} parent=1 // pred_check_branch
      %1203 = sbr.rel (0) target = $region85
    $region84: #{tpu_custom_call.1} parent=1 // pred_region
      %1204 = dma.done [#allocation16], 256
    $region85: #{tpu_custom_call.1} parent=1 // pred_fallthru
      _
    // Predicated region
    $region86: #{tpu_custom_call.1} parent=1 // pred_check
      _
    $region87: #{tpu_custom_call.1} parent=1 // pred_check_branch
      %1206 = sbr.rel (0) target = $region89
    $region88: #{tpu_custom_call.1} parent=1 // pred_region
      %1207 = dma.done [#allocation16], 256
    $region89: #{tpu_custom_call.1} parent=1 // pred_fallthru
      _
    %1208 = vsyncpa [#allocation3], 1
    %1209 = vsyncpa [#allocation6], 1
    %1210 = vsyncpa [#allocation9], 1
    %1211 = vsyncpa [#allocation12], 1
    %1212 = vsyncpa [#allocation4], 1
    %1213 = vsyncpa [#allocation16], 1

</llo_original>
